<compile_context>
chip_gen: v5e
topology: v5e:2x2
jax: 0.10.0
libtpu: 0.0.40
codegen_flags: <defaults>
</compile_context>

<pallas_src>
import jax
import jax.numpy as jnp
from jax.experimental import pallas as pl
from jax.experimental.pallas import tpu as pltpu


NUM_CLASSES = 10
_LANE = 128


def _round_up(x, m):
    return (x + m - 1) // m * m


# ---------------- Pallas kernels ----------------

def _conv_relu_pool_kernel(p_ref, w_ref, b_ref, o_ref):
    """Fused conv(+bias)+ReLU+2x2 max-pool.

    p_ref: [4, TM, K] bf16 -- im2col rows grouped by 2x2-pool candidate
    w_ref: [K, OC]   bf16 -- conv weights in matmul layout
    b_ref: [1, OC]   f32
    o_ref: [TM, OC]  bf16 -- max_{q<4} relu(p[q] @ w + b)
    (ReLU is monotone, so max-of-relu == relu-of-max == pool(relu(conv)).)
    """
    bias = b_ref[...]                                   # hoist: load once
    acc = None
    for q in range(4):                                  # static unroll
        y = jnp.dot(p_ref[q], w_ref[...],
                    preferred_element_type=jnp.float32) + bias
        y = jnp.maximum(y, 0.0)
        acc = y if acc is None else jnp.maximum(acc, y)
    o_ref[...] = acc.astype(o_ref.dtype)


def _mlp_head_kernel(x_ref, w1_ref, b1_ref, w2_ref, b2_ref, w3_ref, b3_ref,
                     o_ref):
    """fc1+ReLU -> fc2+ReLU -> fc3 fused; all weights resident in VMEM.

    Intermediates never touch HBM. o_ref's last dim is padded to 128 lanes
    (w3/b3 are zero-padded), so the final store is lane-dense.
    """
    h = jnp.dot(x_ref[...], w1_ref[...],
                preferred_element_type=jnp.float32) + b1_ref[...]
    h = jnp.maximum(h, 0.0).astype(w2_ref.dtype)
    h = jnp.dot(h, w2_ref[...],
                preferred_element_type=jnp.float32) + b2_ref[...]
    h = jnp.maximum(h, 0.0).astype(w3_ref.dtype)
    o_ref[...] = jnp.dot(h, w3_ref[...],
                         preferred_element_type=jnp.float32) + b3_ref[...]


# ---------------- Wrappers ----------------

def _pool_im2col(x_nhwc, kh, kw, pad):
    """NHWC -> [4, N*PH*PW, C*KH*KW] patches grouped by 2x2-pool candidate.

    Column order is (C, KH, KW), matching PyTorch Conv2d weight flattening.
    Total bytes equal a plain im2col (4 * PH*PW == OH*OW), so fusing the pool
    this way adds no HBM traffic.
    """
    # TODO(synk): patch extraction is left as XLA layout glue; an in-kernel
    # gather via manual DMA would cut HBM traffic further on big batches.
    n, h, w, c = x_nhwc.shape
    xp = jnp.pad(x_nhwc, ((0, 0), (pad, pad), (pad, pad), (0, 0)))
    oh = h + 2 * pad - kh + 1
    ow = w + 2 * pad - kw + 1
    ph, pw = oh // 2, ow // 2
    cols = []
    for ci in range(c):
        for i in range(kh):
            for j in range(kw):
                cols.append(xp[:, i:i + oh, j:j + ow, ci])
    pat = jnp.stack(cols, axis=-1)                      # [N, OH, OW, K]
    cand = jnp.stack([pat[:, dy::2, dx::2, :]
                      for dy in (0, 1) for dx in (0, 1)], axis=0)
    return cand.reshape(4, n * ph * pw, c * kh * kw), ph, pw


def conv_relu_pool(x_nhwc, wmat, bias, *, pad, tile_m=1024):
    """Fused conv2d + bias + ReLU + 2x2/2 max-pool. wmat: [C*KH*KW, OC] bf16.

    Returns bf16 NHWC activations (the next stage consumes bf16 anyway).
    """
    n = x_nhwc.shape[0]
    k, oc = wmat.shape
    x_nhwc = x_nhwc.astype(jnp.bfloat16)        # halve glue-tensor HBM bytes
    cand, ph, pw = _pool_im2col(x_nhwc, 5, 5, pad)
    m = n * ph * pw
    tm = min(tile_m, _round_up(m, 8))
    mp = _round_up(m, tm)
    if mp != m:
        cand = jnp.pad(cand, ((0, 0), (0, mp - m), (0, 0)))
    out = pl.pallas_call(
        _conv_relu_pool_kernel,
        out_shape=jax.ShapeDtypeStruct((mp, oc), jnp.bfloat16),
        grid=(mp // tm,),
        in_specs=[
            pl.BlockSpec((4, tm, k), lambda i: (0, i, 0)),
            pl.BlockSpec((k, oc), lambda i: (0, 0)),
            pl.BlockSpec((1, oc), lambda i: (0, 0)),
        ],
        out_specs=pl.BlockSpec((tm, oc), lambda i: (i, 0)),
        compiler_params=pltpu.CompilerParams(
            dimension_semantics=("parallel",)),
    )(cand, wmat, bias)
    return out[:m].reshape(n, ph, pw, oc)               # NHWC, bf16


def mlp_head(x, w1, b1, w2, b2, w3p, b3p, *, tile_m=512):
    """Fused fc1 -> ReLU -> fc2 -> ReLU -> fc3. x: [N, 400] (NHWC flatten)."""
    n, kin = x.shape
    x = x.astype(jnp.bfloat16)                  # no-op when fed by conv stage
    tm = min(tile_m, _round_up(n, 8))
    mp = _round_up(n, tm)
    if mp != n:
        x = jnp.pad(x, ((0, mp - n), (0, 0)))
    npad = w3p.shape[1]                                 # 128 (lane-dense)
    out = pl.pallas_call(
        _mlp_head_kernel,
        out_shape=jax.ShapeDtypeStruct((mp, npad), jnp.float32),
        grid=(mp // tm,),
        in_specs=[
            pl.BlockSpec((tm, kin), lambda i: (i, 0)),
            pl.BlockSpec(w1.shape, lambda i: (0, 0)),
            pl.BlockSpec(b1.shape, lambda i: (0, 0)),
            pl.BlockSpec(w2.shape, lambda i: (0, 0)),
            pl.BlockSpec(b2.shape, lambda i: (0, 0)),
            pl.BlockSpec(w3p.shape, lambda i: (0, 0)),
            pl.BlockSpec(b3p.shape, lambda i: (0, 0)),
        ],
        out_specs=pl.BlockSpec((tm, npad), lambda i: (i, 0)),
        compiler_params=pltpu.CompilerParams(
            dimension_semantics=("parallel",)),
    )(x, w1, b1, w2, b2, w3p, b3p)
    return out[:n, :NUM_CLASSES]


# ---------------- Parameters & forward ----------------

def init_params(key):
    """PyTorch-layout parameters (fc weights stored transposed: [in, out])."""
    ks = jax.random.split(key, 10)

    def u(k, shape, fan_in):
        bound = 1.0 / jnp.sqrt(jnp.float32(fan_in))
        return jax.random.uniform(k, shape, jnp.float32, -bound, bound)

    return {
        "w_conv1": u(ks[0], (6, 1, 5, 5), 1 * 5 * 5),
        "b_conv1": u(ks[1], (6,), 1 * 5 * 5),
        "w_conv2": u(ks[2], (16, 6, 5, 5), 6 * 5 * 5),
        "b_conv2": u(ks[3], (16,), 6 * 5 * 5),
        # rows indexed in PyTorch's NCHW .view(-1, 400) order, i.e. (c, h, w)
        "w_fc1": u(ks[4], (400, 120), 400),
        "b_fc1": u(ks[5], (120,), 400),
        "w_fc2": u(ks[6], (120, 84), 120),
        "b_fc2": u(ks[7], (84,), 120),
        "w_fc3": u(ks[8], (84, 10), 84),
        "b_fc3": u(ks[9], (10,), 84),
    }


def prepare_params(params):
    """One-time prep outside the jit-hot path: reshape / permute / pad / cast."""
    bf16, f32 = jnp.bfloat16, jnp.float32
    oc1 = params["w_conv1"].shape[0]
    oc2 = params["w_conv2"].shape[0]
    # Conv weights -> [C*KH*KW, OC] matmul layout, bf16 (f32 accumulate in-kernel).
    wc1 = params["w_conv1"].reshape(oc1, -1).T.astype(bf16)
    wc2 = params["w_conv2"].reshape(oc2, -1).T.astype(bf16)
    # fc1: permute input rows from PyTorch's (c, h, w) flatten order to our
    # NHWC (h, w, c) flatten order so the forward semantics are preserved.
    hh, ww, cc = jnp.meshgrid(jnp.arange(5), jnp.arange(5), jnp.arange(16),
                              indexing="ij")
    perm = (cc * 25 + hh * 5 + ww).reshape(-1)
    wf1 = params["w_fc1"][perm].astype(bf16)
    wf2 = params["w_fc2"].astype(bf16)
    # fc3: zero-pad output lanes to 128 so the final store is lane-dense.
    kin, nout = params["w_fc3"].shape
    wf3 = jnp.zeros((kin, _LANE), f32).at[:, :nout].set(params["w_fc3"])
    bf3 = jnp.zeros((1, _LANE), f32).at[:, :nout].set(params["b_fc3"])
    return {
        "wc1": wc1, "bc1": params["b_conv1"].reshape(1, -1).astype(f32),
        "wc2": wc2, "bc2": params["b_conv2"].reshape(1, -1).astype(f32),
        "wf1": wf1, "bf1": params["b_fc1"].reshape(1, -1).astype(f32),
        "wf2": wf2, "bf2": params["b_fc2"].reshape(1, -1).astype(f32),
        "wf3": wf3.astype(bf16), "bf3": bf3,
    }


@jax.jit
def lenet5_forward(prepped, x):
    # x: [N, 1, 28, 28] NCHW (PyTorch convention). Go NHWC once (C=1: cheap),
    # stay NHWC through the conv/pool pipeline (channels on the lane axis).
    x = jnp.transpose(x, (0, 2, 3, 1)).astype(jnp.float32)
    x = conv_relu_pool(x, prepped["wc1"], prepped["bc1"], pad=2)   # [N,14,14,6]
    x = conv_relu_pool(x, prepped["wc2"], prepped["bc2"], pad=0)   # [N,5,5,16]
    n = x.shape[0]
    x = x.reshape(n, 5 * 5 * 16)      # NHWC flatten; wf1 rows are pre-permuted
    return mlp_head(x, prepped["wf1"], prepped["bf1"],
                    prepped["wf2"], prepped["bf2"],
                    prepped["wf3"], prepped["bf3"])                # [N, 10]


if __name__ == "__main__":
    key = jax.random.PRNGKey(0)
    kp, kx = jax.random.split(key)
    params = init_params(kp)
    prepped = prepare_params(params)
    # MNIST-shaped input implied by fc1 = Linear(16*5*5, 120): 28x28, 1 channel.
    x = jax.random.normal(kx, (2, 1, 28, 28), dtype=jnp.float32)
    out = lenet5_forward(prepped, x)
    out = jax.block_until_ready(out)
    assert out.shape == (2, NUM_CLASSES), out.shape
    assert bool(jnp.all(jnp.isfinite(out)))
    print("KERNEL_OK")
</pallas_src>

<mosaic_0001>
module attributes {stable_mosaic.version = 11 : i64} {
  func.func @_conv_relu_pool_kernel(%arg0: i32, %arg1: memref<4x392x25xbf16, #tpu.memory_space<vmem>>, %arg2: memref<25x6xbf16, #tpu.memory_space<vmem>>, %arg3: memref<1x6xf32, #tpu.memory_space<vmem>>, %arg4: memref<392x6xbf16, #tpu.memory_space<vmem>>) attributes {dimension_semantics = [#tpu.dimension_semantics<parallel>], iteration_bounds = array<i64: 1>, scalar_prefetch = 0 : i64, scratch_operands = 0 : i64, tpu.core_type = #tpu.core_type<tc>, window_params = [{transform_indices = @transform_0, window_bounds = array<i64: 4, 392, 25>}, {pipeline_mode = #tpu.pipeline_mode<synchronous>, transform_indices = @transform_1, window_bounds = array<i64: 25, 6>}, {pipeline_mode = #tpu.pipeline_mode<synchronous>, transform_indices = @transform_2, window_bounds = array<i64: 1, 6>}, {transform_indices = @transform_3, window_bounds = array<i64: 392, 6>}]} {
    %c0 = arith.constant 0 : index
    %c0_0 = arith.constant 0 : index
    %0 = vector.load %arg3[%c0, %c0_0] : memref<1x6xf32, #tpu.memory_space<vmem>>, vector<1x6xf32>
    %c0_1 = arith.constant 0 : index
    %c0_2 = arith.constant 0 : index
    %c0_3 = arith.constant 0 : index
    %1 = vector.load %arg1[%c0_1, %c0_2, %c0_3] : memref<4x392x25xbf16, #tpu.memory_space<vmem>>, vector<1x392x25xbf16>
    %2 = vector.shape_cast %1 : vector<1x392x25xbf16> to vector<392x25xbf16>
    %c0_4 = arith.constant 0 : index
    %c0_5 = arith.constant 0 : index
    %3 = vector.load %arg2[%c0_4, %c0_5] : memref<25x6xbf16, #tpu.memory_space<vmem>>, vector<25x6xbf16>
    %cst = arith.constant dense<0.000000e+00> : vector<392x6xf32>
    %4 = tpu.matmul %2, %3, %cst {dimension_numbers = #tpu.dot_dimension_numbers<[1], [0], [0], [1], [0, 0, 1, 1], [], []>} : vector<392x25xbf16>, vector<25x6xbf16>, vector<392x6xf32> -> vector<392x6xf32>
    %5 = vector.broadcast %0 : vector<1x6xf32> to vector<392x6xf32>
    %6 = arith.addf %4, %5 : vector<392x6xf32>
    %cst_6 = arith.constant 0.000000e+00 : f32
    %7 = vector.broadcast %cst_6 : f32 to vector<392x6xf32>
    %8 = arith.maximumf %6, %7 : vector<392x6xf32>
    %c1 = arith.constant 1 : index
    %c0_7 = arith.constant 0 : index
    %c0_8 = arith.constant 0 : index
    %9 = vector.load %arg1[%c1, %c0_7, %c0_8] : memref<4x392x25xbf16, #tpu.memory_space<vmem>>, vector<1x392x25xbf16>
    %10 = vector.shape_cast %9 : vector<1x392x25xbf16> to vector<392x25xbf16>
    %c0_9 = arith.constant 0 : index
    %c0_10 = arith.constant 0 : index
    %11 = vector.load %arg2[%c0_9, %c0_10] : memref<25x6xbf16, #tpu.memory_space<vmem>>, vector<25x6xbf16>
    %cst_11 = arith.constant dense<0.000000e+00> : vector<392x6xf32>
    %12 = tpu.matmul %10, %11, %cst_11 {dimension_numbers = #tpu.dot_dimension_numbers<[1], [0], [0], [1], [0, 0, 1, 1], [], []>} : vector<392x25xbf16>, vector<25x6xbf16>, vector<392x6xf32> -> vector<392x6xf32>
    %13 = vector.broadcast %0 : vector<1x6xf32> to vector<392x6xf32>
    %14 = arith.addf %12, %13 : vector<392x6xf32>
    %cst_12 = arith.constant 0.000000e+00 : f32
    %15 = vector.broadcast %cst_12 : f32 to vector<392x6xf32>
    %16 = arith.maximumf %14, %15 : vector<392x6xf32>
    %17 = arith.maximumf %8, %16 : vector<392x6xf32>
    %c2 = arith.constant 2 : index
    %c0_13 = arith.constant 0 : index
    %c0_14 = arith.constant 0 : index
    %18 = vector.load %arg1[%c2, %c0_13, %c0_14] : memref<4x392x25xbf16, #tpu.memory_space<vmem>>, vector<1x392x25xbf16>
    %19 = vector.shape_cast %18 : vector<1x392x25xbf16> to vector<392x25xbf16>
    %c0_15 = arith.constant 0 : index
    %c0_16 = arith.constant 0 : index
    %20 = vector.load %arg2[%c0_15, %c0_16] : memref<25x6xbf16, #tpu.memory_space<vmem>>, vector<25x6xbf16>
    %cst_17 = arith.constant dense<0.000000e+00> : vector<392x6xf32>
    %21 = tpu.matmul %19, %20, %cst_17 {dimension_numbers = #tpu.dot_dimension_numbers<[1], [0], [0], [1], [0, 0, 1, 1], [], []>} : vector<392x25xbf16>, vector<25x6xbf16>, vector<392x6xf32> -> vector<392x6xf32>
    %22 = vector.broadcast %0 : vector<1x6xf32> to vector<392x6xf32>
    %23 = arith.addf %21, %22 : vector<392x6xf32>
    %cst_18 = arith.constant 0.000000e+00 : f32
    %24 = vector.broadcast %cst_18 : f32 to vector<392x6xf32>
    %25 = arith.maximumf %23, %24 : vector<392x6xf32>
    %26 = arith.maximumf %17, %25 : vector<392x6xf32>
    %c3 = arith.constant 3 : index
    %c0_19 = arith.constant 0 : index
    %c0_20 = arith.constant 0 : index
    %27 = vector.load %arg1[%c3, %c0_19, %c0_20] : memref<4x392x25xbf16, #tpu.memory_space<vmem>>, vector<1x392x25xbf16>
    %28 = vector.shape_cast %27 : vector<1x392x25xbf16> to vector<392x25xbf16>
    %c0_21 = arith.constant 0 : index
    %c0_22 = arith.constant 0 : index
    %29 = vector.load %arg2[%c0_21, %c0_22] : memref<25x6xbf16, #tpu.memory_space<vmem>>, vector<25x6xbf16>
    %cst_23 = arith.constant dense<0.000000e+00> : vector<392x6xf32>
    %30 = tpu.matmul %28, %29, %cst_23 {dimension_numbers = #tpu.dot_dimension_numbers<[1], [0], [0], [1], [0, 0, 1, 1], [], []>} : vector<392x25xbf16>, vector<25x6xbf16>, vector<392x6xf32> -> vector<392x6xf32>
    %31 = vector.broadcast %0 : vector<1x6xf32> to vector<392x6xf32>
    %32 = arith.addf %30, %31 : vector<392x6xf32>
    %cst_24 = arith.constant 0.000000e+00 : f32
    %33 = vector.broadcast %cst_24 : f32 to vector<392x6xf32>
    %34 = arith.maximumf %32, %33 : vector<392x6xf32>
    %35 = arith.maximumf %26, %34 : vector<392x6xf32>
    %36 = arith.truncf %35 : vector<392x6xf32> to vector<392x6xbf16>
    %c0_25 = arith.constant 0 : index
    %c0_26 = arith.constant 0 : index
    %37 = vector.load %arg4[%c0_25, %c0_26] : memref<392x6xbf16, #tpu.memory_space<vmem>>, vector<392x6xbf16>
    tpu.vector_store %arg4[%c0_25, %c0_26], %36 {strides = array<i32>} : memref<392x6xbf16, #tpu.memory_space<vmem>>, vector<392x6xbf16>,
    return
  }
  func.func @transform_0(%arg0: i32) -> (i32, i32, i32) {
    %c0_i32 = arith.constant 0 : i32
    %c0_i32_0 = arith.constant 0 : i32
    %c0_i32_1 = arith.constant 0 : i32
    return %c0_i32, %arg0, %c0_i32_0 : i32, i32, i32
  }
  func.func @transform_1(%arg0: i32) -> (i32, i32) {
    %c0_i32 = arith.constant 0 : i32
    %c0_i32_0 = arith.constant 0 : i32
    %c0_i32_1 = arith.constant 0 : i32
    return %c0_i32, %c0_i32_0 : i32, i32
  }
  func.func @transform_2(%arg0: i32) -> (i32, i32) {
    %c0_i32 = arith.constant 0 : i32
    %c0_i32_0 = arith.constant 0 : i32
    %c0_i32_1 = arith.constant 0 : i32
    return %c0_i32, %c0_i32_0 : i32, i32
  }
  func.func @transform_3(%arg0: i32) -> (i32, i32) {
    %c0_i32 = arith.constant 0 : i32
    %c0_i32_0 = arith.constant 0 : i32
    return %arg0, %c0_i32 : i32, i32
  }
}

module attributes {stable_mosaic.version = 11 : i64} {
  func.func @_conv_relu_pool_kernel(%arg0: i32, %arg1: memref<4x56x150xbf16, #tpu.memory_space<vmem>>, %arg2: memref<150x16xbf16, #tpu.memory_space<vmem>>, %arg3: memref<1x16xf32, #tpu.memory_space<vmem>>, %arg4: memref<56x16xbf16, #tpu.memory_space<vmem>>) attributes {dimension_semantics = [#tpu.dimension_semantics<parallel>], iteration_bounds = array<i64: 1>, scalar_prefetch = 0 : i64, scratch_operands = 0 : i64, tpu.core_type = #tpu.core_type<tc>, window_params = [{transform_indices = @transform_0, window_bounds = array<i64: 4, 56, 150>}, {pipeline_mode = #tpu.pipeline_mode<synchronous>, transform_indices = @transform_1, window_bounds = array<i64: 150, 16>}, {pipeline_mode = #tpu.pipeline_mode<synchronous>, transform_indices = @transform_2, window_bounds = array<i64: 1, 16>}, {transform_indices = @transform_3, window_bounds = array<i64: 56, 16>}]} {
    %c0 = arith.constant 0 : index
    %c0_0 = arith.constant 0 : index
    %0 = vector.load %arg3[%c0, %c0_0] : memref<1x16xf32, #tpu.memory_space<vmem>>, vector<1x16xf32>
    %c0_1 = arith.constant 0 : index
    %c0_2 = arith.constant 0 : index
    %c0_3 = arith.constant 0 : index
    %1 = vector.load %arg1[%c0_1, %c0_2, %c0_3] : memref<4x56x150xbf16, #tpu.memory_space<vmem>>, vector<1x56x150xbf16>
    %2 = vector.shape_cast %1 : vector<1x56x150xbf16> to vector<56x150xbf16>
    %c0_4 = arith.constant 0 : index
    %c0_5 = arith.constant 0 : index
    %3 = vector.load %arg2[%c0_4, %c0_5] : memref<150x16xbf16, #tpu.memory_space<vmem>>, vector<150x16xbf16>
    %cst = arith.constant dense<0.000000e+00> : vector<56x16xf32>
    %4 = tpu.matmul %2, %3, %cst {dimension_numbers = #tpu.dot_dimension_numbers<[1], [0], [0], [1], [0, 0, 1, 1], [], []>} : vector<56x150xbf16>, vector<150x16xbf16>, vector<56x16xf32> -> vector<56x16xf32>
    %5 = vector.broadcast %0 : vector<1x16xf32> to vector<56x16xf32>
    %6 = arith.addf %4, %5 : vector<56x16xf32>
    %cst_6 = arith.constant 0.000000e+00 : f32
    %7 = vector.broadcast %cst_6 : f32 to vector<56x16xf32>
    %8 = arith.maximumf %6, %7 : vector<56x16xf32>
    %c1 = arith.constant 1 : index
    %c0_7 = arith.constant 0 : index
    %c0_8 = arith.constant 0 : index
    %9 = vector.load %arg1[%c1, %c0_7, %c0_8] : memref<4x56x150xbf16, #tpu.memory_space<vmem>>, vector<1x56x150xbf16>
    %10 = vector.shape_cast %9 : vector<1x56x150xbf16> to vector<56x150xbf16>
    %c0_9 = arith.constant 0 : index
    %c0_10 = arith.constant 0 : index
    %11 = vector.load %arg2[%c0_9, %c0_10] : memref<150x16xbf16, #tpu.memory_space<vmem>>, vector<150x16xbf16>
    %cst_11 = arith.constant dense<0.000000e+00> : vector<56x16xf32>
    %12 = tpu.matmul %10, %11, %cst_11 {dimension_numbers = #tpu.dot_dimension_numbers<[1], [0], [0], [1], [0, 0, 1, 1], [], []>} : vector<56x150xbf16>, vector<150x16xbf16>, vector<56x16xf32> -> vector<56x16xf32>
    %13 = vector.broadcast %0 : vector<1x16xf32> to vector<56x16xf32>
    %14 = arith.addf %12, %13 : vector<56x16xf32>
    %cst_12 = arith.constant 0.000000e+00 : f32
    %15 = vector.broadcast %cst_12 : f32 to vector<56x16xf32>
    %16 = arith.maximumf %14, %15 : vector<56x16xf32>
    %17 = arith.maximumf %8, %16 : vector<56x16xf32>
    %c2 = arith.constant 2 : index
    %c0_13 = arith.constant 0 : index
    %c0_14 = arith.constant 0 : index
    %18 = vector.load %arg1[%c2, %c0_13, %c0_14] : memref<4x56x150xbf16, #tpu.memory_space<vmem>>, vector<1x56x150xbf16>
    %19 = vector.shape_cast %18 : vector<1x56x150xbf16> to vector<56x150xbf16>
    %c0_15 = arith.constant 0 : index
    %c0_16 = arith.constant 0 : index
    %20 = vector.load %arg2[%c0_15, %c0_16] : memref<150x16xbf16, #tpu.memory_space<vmem>>, vector<150x16xbf16>
    %cst_17 = arith.constant dense<0.000000e+00> : vector<56x16xf32>
    %21 = tpu.matmul %19, %20, %cst_17 {dimension_numbers = #tpu.dot_dimension_numbers<[1], [0], [0], [1], [0, 0, 1, 1], [], []>} : vector<56x150xbf16>, vector<150x16xbf16>, vector<56x16xf32> -> vector<56x16xf32>
    %22 = vector.broadcast %0 : vector<1x16xf32> to vector<56x16xf32>
    %23 = arith.addf %21, %22 : vector<56x16xf32>
    %cst_18 = arith.constant 0.000000e+00 : f32
    %24 = vector.broadcast %cst_18 : f32 to vector<56x16xf32>
    %25 = arith.maximumf %23, %24 : vector<56x16xf32>
    %26 = arith.maximumf %17, %25 : vector<56x16xf32>
    %c3 = arith.constant 3 : index
    %c0_19 = arith.constant 0 : index
    %c0_20 = arith.constant 0 : index
    %27 = vector.load %arg1[%c3, %c0_19, %c0_20] : memref<4x56x150xbf16, #tpu.memory_space<vmem>>, vector<1x56x150xbf16>
    %28 = vector.shape_cast %27 : vector<1x56x150xbf16> to vector<56x150xbf16>
    %c0_21 = arith.constant 0 : index
    %c0_22 = arith.constant 0 : index
    %29 = vector.load %arg2[%c0_21, %c0_22] : memref<150x16xbf16, #tpu.memory_space<vmem>>, vector<150x16xbf16>
    %cst_23 = arith.constant dense<0.000000e+00> : vector<56x16xf32>
    %30 = tpu.matmul %28, %29, %cst_23 {dimension_numbers = #tpu.dot_dimension_numbers<[1], [0], [0], [1], [0, 0, 1, 1], [], []>} : vector<56x150xbf16>, vector<150x16xbf16>, vector<56x16xf32> -> vector<56x16xf32>
    %31 = vector.broadcast %0 : vector<1x16xf32> to vector<56x16xf32>
    %32 = arith.addf %30, %31 : vector<56x16xf32>
    %cst_24 = arith.constant 0.000000e+00 : f32
    %33 = vector.broadcast %cst_24 : f32 to vector<56x16xf32>
    %34 = arith.maximumf %32, %33 : vector<56x16xf32>
    %35 = arith.maximumf %26, %34 : vector<56x16xf32>
    %36 = arith.truncf %35 : vector<56x16xf32> to vector<56x16xbf16>
    %c0_25 = arith.constant 0 : index
    %c0_26 = arith.constant 0 : index
    %37 = vector.load %arg4[%c0_25, %c0_26] : memref<56x16xbf16, #tpu.memory_space<vmem>>, vector<56x16xbf16>
    tpu.vector_store %arg4[%c0_25, %c0_26], %36 {strides = array<i32>} : memref<56x16xbf16, #tpu.memory_space<vmem>>, vector<56x16xbf16>,
    return
  }
  func.func @transform_0(%arg0: i32) -> (i32, i32, i32) {
    %c0_i32 = arith.constant 0 : i32
    %c0_i32_0 = arith.constant 0 : i32
    %c0_i32_1 = arith.constant 0 : i32
    return %c0_i32, %arg0, %c0_i32_0 : i32, i32, i32
  }
  func.func @transform_1(%arg0: i32) -> (i32, i32) {
    %c0_i32 = arith.constant 0 : i32
    %c0_i32_0 = arith.constant 0 : i32
    %c0_i32_1 = arith.constant 0 : i32
    return %c0_i32, %c0_i32_0 : i32, i32
  }
  func.func @transform_2(%arg0: i32) -> (i32, i32) {
    %c0_i32 = arith.constant 0 : i32
    %c0_i32_0 = arith.constant 0 : i32
    %c0_i32_1 = arith.constant 0 : i32
    return %c0_i32, %c0_i32_0 : i32, i32
  }
  func.func @transform_3(%arg0: i32) -> (i32, i32) {
    %c0_i32 = arith.constant 0 : i32
    %c0_i32_0 = arith.constant 0 : i32
    return %arg0, %c0_i32 : i32, i32
  }
}

module attributes {stable_mosaic.version = 11 : i64} {
  func.func @_mlp_head_kernel(%arg0: i32, %arg1: memref<8x400xbf16, #tpu.memory_space<vmem>>, %arg2: memref<400x120xbf16, #tpu.memory_space<vmem>>, %arg3: memref<1x120xf32, #tpu.memory_space<vmem>>, %arg4: memref<120x84xbf16, #tpu.memory_space<vmem>>, %arg5: memref<1x84xf32, #tpu.memory_space<vmem>>, %arg6: memref<84x128xbf16, #tpu.memory_space<vmem>>, %arg7: memref<1x128xf32, #tpu.memory_space<vmem>>, %arg8: memref<8x128xf32, #tpu.memory_space<vmem>>) attributes {dimension_semantics = [#tpu.dimension_semantics<parallel>], iteration_bounds = array<i64: 1>, scalar_prefetch = 0 : i64, scratch_operands = 0 : i64, tpu.core_type = #tpu.core_type<tc>, window_params = [{transform_indices = @transform_0, window_bounds = array<i64: 8, 400>}, {pipeline_mode = #tpu.pipeline_mode<synchronous>, transform_indices = @transform_1, window_bounds = array<i64: 400, 120>}, {pipeline_mode = #tpu.pipeline_mode<synchronous>, transform_indices = @transform_2, window_bounds = array<i64: 1, 120>}, {pipeline_mode = #tpu.pipeline_mode<synchronous>, transform_indices = @transform_3, window_bounds = array<i64: 120, 84>}, {pipeline_mode = #tpu.pipeline_mode<synchronous>, transform_indices = @transform_4, window_bounds = array<i64: 1, 84>}, {pipeline_mode = #tpu.pipeline_mode<synchronous>, transform_indices = @transform_5, window_bounds = array<i64: 84, 128>}, {pipeline_mode = #tpu.pipeline_mode<synchronous>, transform_indices = @transform_6, window_bounds = array<i64: 1, 128>}, {transform_indices = @transform_7, window_bounds = array<i64: 8, 128>}]} {
    %c0 = arith.constant 0 : index
    %c0_0 = arith.constant 0 : index
    %0 = vector.load %arg1[%c0, %c0_0] : memref<8x400xbf16, #tpu.memory_space<vmem>>, vector<8x400xbf16>
    %c0_1 = arith.constant 0 : index
    %c0_2 = arith.constant 0 : index
    %1 = vector.load %arg2[%c0_1, %c0_2] : memref<400x120xbf16, #tpu.memory_space<vmem>>, vector<400x120xbf16>
    %cst = arith.constant dense<0.000000e+00> : vector<8x120xf32>
    %2 = tpu.matmul %0, %1, %cst {dimension_numbers = #tpu.dot_dimension_numbers<[1], [0], [0], [1], [0, 0, 1, 1], [], []>} : vector<8x400xbf16>, vector<400x120xbf16>, vector<8x120xf32> -> vector<8x120xf32>
    %c0_3 = arith.constant 0 : index
    %c0_4 = arith.constant 0 : index
    %3 = vector.load %arg3[%c0_3, %c0_4] : memref<1x120xf32, #tpu.memory_space<vmem>>, vector<1x120xf32>
    %4 = vector.broadcast %3 : vector<1x120xf32> to vector<8x120xf32>
    %5 = arith.addf %2, %4 : vector<8x120xf32>
    %cst_5 = arith.constant 0.000000e+00 : f32
    %6 = vector.broadcast %cst_5 : f32 to vector<8x120xf32>
    %7 = arith.maximumf %5, %6 : vector<8x120xf32>
    %8 = arith.truncf %7 : vector<8x120xf32> to vector<8x120xbf16>
    %c0_6 = arith.constant 0 : index
    %c0_7 = arith.constant 0 : index
    %9 = vector.load %arg4[%c0_6, %c0_7] : memref<120x84xbf16, #tpu.memory_space<vmem>>, vector<120x84xbf16>
    %cst_8 = arith.constant dense<0.000000e+00> : vector<8x84xf32>
    %10 = tpu.matmul %8, %9, %cst_8 {dimension_numbers = #tpu.dot_dimension_numbers<[1], [0], [0], [1], [0, 0, 1, 1], [], []>} : vector<8x120xbf16>, vector<120x84xbf16>, vector<8x84xf32> -> vector<8x84xf32>
    %c0_9 = arith.constant 0 : index
    %c0_10 = arith.constant 0 : index
    %11 = vector.load %arg5[%c0_9, %c0_10] : memref<1x84xf32, #tpu.memory_space<vmem>>, vector<1x84xf32>
    %12 = vector.broadcast %11 : vector<1x84xf32> to vector<8x84xf32>
    %13 = arith.addf %10, %12 : vector<8x84xf32>
    %cst_11 = arith.constant 0.000000e+00 : f32
    %14 = vector.broadcast %cst_11 : f32 to vector<8x84xf32>
    %15 = arith.maximumf %13, %14 : vector<8x84xf32>
    %16 = arith.truncf %15 : vector<8x84xf32> to vector<8x84xbf16>
    %c0_12 = arith.constant 0 : index
    %c0_13 = arith.constant 0 : index
    %17 = vector.load %arg6[%c0_12, %c0_13] : memref<84x128xbf16, #tpu.memory_space<vmem>>, vector<84x128xbf16>
    %cst_14 = arith.constant dense<0.000000e+00> : vector<8x128xf32>
    %18 = tpu.matmul %16, %17, %cst_14 {dimension_numbers = #tpu.dot_dimension_numbers<[1], [0], [0], [1], [0, 0, 1, 1], [], []>} : vector<8x84xbf16>, vector<84x128xbf16>, vector<8x128xf32> -> vector<8x128xf32>
    %c0_15 = arith.constant 0 : index
    %c0_16 = arith.constant 0 : index
    %19 = vector.load %arg7[%c0_15, %c0_16] : memref<1x128xf32, #tpu.memory_space<vmem>>, vector<1x128xf32>
    %20 = vector.broadcast %19 : vector<1x128xf32> to vector<8x128xf32>
    %21 = arith.addf %18, %20 : vector<8x128xf32>
    %c0_17 = arith.constant 0 : index
    %c0_18 = arith.constant 0 : index
    %22 = vector.load %arg8[%c0_17, %c0_18] : memref<8x128xf32, #tpu.memory_space<vmem>>, vector<8x128xf32>
    tpu.vector_store %arg8[%c0_17, %c0_18], %21 {strides = array<i32>} : memref<8x128xf32, #tpu.memory_space<vmem>>, vector<8x128xf32>,
    return
  }
  func.func @transform_0(%arg0: i32) -> (i32, i32) {
    %c0_i32 = arith.constant 0 : i32
    %c0_i32_0 = arith.constant 0 : i32
    return %arg0, %c0_i32 : i32, i32
  }
  func.func @transform_1(%arg0: i32) -> (i32, i32) {
    %c0_i32 = arith.constant 0 : i32
    %c0_i32_0 = arith.constant 0 : i32
    %c0_i32_1 = arith.constant 0 : i32
    return %c0_i32, %c0_i32_0 : i32, i32
  }
  func.func @transform_2(%arg0: i32) -> (i32, i32) {
    %c0_i32 = arith.constant 0 : i32
    %c0_i32_0 = arith.constant 0 : i32
    %c0_i32_1 = arith.constant 0 : i32
    return %c0_i32, %c0_i32_0 : i32, i32
  }
  func.func @transform_3(%arg0: i32) -> (i32, i32) {
    %c0_i32 = arith.constant 0 : i32
    %c0_i32_0 = arith.constant 0 : i32
    %c0_i32_1 = arith.constant 0 : i32
    return %c0_i32, %c0_i32_0 : i32, i32
  }
  func.func @transform_4(%arg0: i32) -> (i32, i32) {
    %c0_i32 = arith.constant 0 : i32
    %c0_i32_0 = arith.constant 0 : i32
    %c0_i32_1 = arith.constant 0 : i32
    return %c0_i32, %c0_i32_0 : i32, i32
  }
  func.func @transform_5(%arg0: i32) -> (i32, i32) {
    %c0_i32 = arith.constant 0 : i32
    %c0_i32_0 = arith.constant 0 : i32
    %c0_i32_1 = arith.constant 0 : i32
    return %c0_i32, %c0_i32_0 : i32, i32
  }
  func.func @transform_6(%arg0: i32) -> (i32, i32) {
    %c0_i32 = arith.constant 0 : i32
    %c0_i32_0 = arith.constant 0 : i32
    %c0_i32_1 = arith.constant 0 : i32
    return %c0_i32, %c0_i32_0 : i32, i32
  }
  func.func @transform_7(%arg0: i32) -> (i32, i32) {
    %c0_i32 = arith.constant 0 : i32
    %c0_i32_0 = arith.constant 0 : i32
    return %arg0, %c0_i32 : i32, i32
  }
}

</mosaic_0001>

<llo_original>
// kernel: lenet5_forward.3
$region0: #{lenet5_forward.3}
  #allocation0 [shape = 'u32[]', space=smem, size = 0x4, offset = 0x4, fixed_abs, tag = 'smem constant byte address 0x4 - core index']
  #allocation1 [shape = 'u32[72,128]{1,0:T(1,128)}', space=vmem, size = 0x9000, scoped, tag = 'internal scratch']
  %s0 = inlined_call_operand.vmem [shape: bf16[4,392,25], index: 0, kind: input, shape index: {}]
  %s1 = inlined_call_operand.vmem [shape: bf16[25,6], index: 1, kind: input, shape index: {}]
  %s2 = inlined_call_operand.vmem [shape: f32[1,6], index: 2, kind: input, shape index: {}]
  %s3 = inlined_call_operand.vmem [shape: bf16[392,6], index: 3, kind: output, shape index: {}]
  %s4 = sld [smem:[#allocation0]]
  $region22: #{lenet5_forward.3} parent=0
    _
  %s6 = ssub.s32 1, %s4
  %s7 = scalar_select 0, %s6, %s4
  // Predicated region
  $region2: #{lenet5_forward.3} parent=0 // pred_check
    _
  $region3: #{lenet5_forward.3} parent=0 // pred_check_branch
    %9 = sbr.rel (0) target = $region5
  $region4: #{lenet5_forward.3} parent=0 // pred_region
    _
  $region5: #{lenet5_forward.3} parent=0 // pred_fallthru
    _
  // Predicated region
  $region6: #{lenet5_forward.3} parent=0 // pred_check
    _
  $region7: #{lenet5_forward.3} parent=0 // pred_check_branch
    %11 = sbr.rel (0) target = $region9
  $region8: #{lenet5_forward.3} parent=0 // pred_region
    _
  $region9: #{lenet5_forward.3} parent=0 // pred_fallthru
    _
  // Predicated region
  $region10: #{lenet5_forward.3} parent=0 // pred_check
    _
  $region11: #{lenet5_forward.3} parent=0 // pred_check_branch
    %13 = sbr.rel (0) target = $region13
  $region12: #{lenet5_forward.3} parent=0 // pred_region
    _
  $region13: #{lenet5_forward.3} parent=0 // pred_fallthru
    _
  %v15 = vld [vmem:[%s2] sm:$0x1]
  %v16 = vld [vmem:[%s0] sm:$0xf]
  %v17 = vld [vmem:[%s0 + $0x4] sm:$0xf]
  %v18 = vld [vmem:[%s0 + $0x8] sm:$0xf]
  %v19 = vld [vmem:[%s0 + $0xc] sm:$0xf]
  %v20 = vld [vmem:[%s0 + $0x10] sm:$0xf]
  %v21 = vld [vmem:[%s0 + $0x14] sm:$0xf]
  %v22 = vld [vmem:[%s0 + $0x18] sm:$0xf]
  %v23 = vld [vmem:[%s0 + $0x1c] sm:$0xf]
  %v24 = vld [vmem:[%s0 + $0x20] sm:$0xf]
  %v25 = vld [vmem:[%s0 + $0x24] sm:$0xf]
  %v26 = vld [vmem:[%s0 + $0x28] sm:$0xf]
  %v27 = vld [vmem:[%s0 + $0x2c] sm:$0xf]
  %v28 = vld [vmem:[%s0 + $0x30] sm:$0xf]
  %v29 = vld [vmem:[%s0 + $0x34] sm:$0xf]
  %v30 = vld [vmem:[%s0 + $0x38] sm:$0xf]
  %v31 = vld [vmem:[%s0 + $0x3c] sm:$0xf]
  %v32 = vld [vmem:[%s0 + $0x40] sm:$0xf]
  %v33 = vld [vmem:[%s0 + $0x44] sm:$0xf]
  %v34 = vld [vmem:[%s0 + $0x48] sm:$0xf]
  %v35 = vld [vmem:[%s0 + $0x4c] sm:$0xf]
  %v36 = vld [vmem:[%s0 + $0x50] sm:$0xf]
  %v37 = vld [vmem:[%s0 + $0x54] sm:$0xf]
  %v38 = vld [vmem:[%s0 + $0x58] sm:$0xf]
  %v39 = vld [vmem:[%s0 + $0x5c] sm:$0xf]
  %v40 = vld [vmem:[%s0 + $0x60] sm:$0xf]
  %v41 = vld [vmem:[%s0 + $0x64] sm:$0xf]
  %v42 = vld [vmem:[%s0 + $0x68] sm:$0xf]
  %v43 = vld [vmem:[%s0 + $0x6c] sm:$0xf]
  %v44 = vld [vmem:[%s0 + $0x70] sm:$0xf]
  %v45 = vld [vmem:[%s0 + $0x74] sm:$0xf]
  %v46 = vld [vmem:[%s0 + $0x78] sm:$0xf]
  %v47 = vld [vmem:[%s0 + $0x7c] sm:$0xf]
  %v48 = vld [vmem:[%s0 + $0x80] sm:$0xf]
  %v49 = vld [vmem:[%s0 + $0x84] sm:$0xf]
  %v50 = vld [vmem:[%s0 + $0x88] sm:$0xf]
  %v51 = vld [vmem:[%s0 + $0x8c] sm:$0xf]
  %v52 = vld [vmem:[%s0 + $0x90] sm:$0xf]
  %v53 = vld [vmem:[%s0 + $0x94] sm:$0xf]
  %v54 = vld [vmem:[%s0 + $0x98] sm:$0xf]
  %v55 = vld [vmem:[%s0 + $0x9c] sm:$0xf]
  %v56 = vld [vmem:[%s0 + $0xa0] sm:$0xf]
  %v57 = vld [vmem:[%s0 + $0xa4] sm:$0xf]
  %v58 = vld [vmem:[%s0 + $0xa8] sm:$0xf]
  %v59 = vld [vmem:[%s0 + $0xac] sm:$0xf]
  %v60 = vld [vmem:[%s0 + $0xb0] sm:$0xf]
  %v61 = vld [vmem:[%s0 + $0xb4] sm:$0xf]
  %v62 = vld [vmem:[%s0 + $0xb8] sm:$0xf]
  %v63 = vld [vmem:[%s0 + $0xbc] sm:$0xf]
  %v64 = vld [vmem:[%s0 + $0xc0] sm:$0xf]
  %v65 = vld [vmem:[%s1] sm:$0xf]
  %v66 = vld [vmem:[%s1 + $0x4] sm:$0xf]
  %v67 = vld [vmem:[%s1 + $0x8] sm:$0xf]
  %v68 = vld [vmem:[%s1 + $0xc] sm:$0x1]
  %v70 = vperm.slane %v15, 0
  %v121 = vunpack.c.l.b16 %v16
  %v122 = vunpack.c.l.b16 %v17
  %v123 = vunpack.c.l.b16 %v18
  %v124 = vunpack.c.l.b16 %v19
  %v125 = vunpack.c.l.b16 %v20
  %v126 = vunpack.c.l.b16 %v21
  %v127 = vunpack.c.l.b16 %v22
  %v128 = vunpack.c.l.b16 %v23
  %v129 = vunpack.c.l.b16 %v24
  %v130 = vunpack.c.l.b16 %v25
  %v131 = vunpack.c.l.b16 %v26
  %v132 = vunpack.c.l.b16 %v27
  %v133 = vunpack.c.l.b16 %v28
  %v134 = vunpack.c.l.b16 %v29
  %v135 = vunpack.c.l.b16 %v30
  %v136 = vunpack.c.l.b16 %v31
  %v137 = vunpack.c.l.b16 %v32
  %v138 = vunpack.c.l.b16 %v33
  %v139 = vunpack.c.l.b16 %v34
  %v140 = vunpack.c.l.b16 %v35
  %v141 = vunpack.c.l.b16 %v36
  %v142 = vunpack.c.l.b16 %v37
  %v143 = vunpack.c.l.b16 %v38
  %v144 = vunpack.c.l.b16 %v39
  %v145 = vunpack.c.l.b16 %v40
  %v146 = vunpack.c.l.b16 %v41
  %v147 = vunpack.c.l.b16 %v42
  %v148 = vunpack.c.l.b16 %v43
  %v149 = vunpack.c.l.b16 %v44
  %v150 = vunpack.c.l.b16 %v45
  %v151 = vunpack.c.l.b16 %v46
  %v152 = vunpack.c.l.b16 %v47
  %v153 = vunpack.c.l.b16 %v48
  %v154 = vunpack.c.l.b16 %v49
  %v155 = vunpack.c.l.b16 %v50
  %v156 = vunpack.c.l.b16 %v51
  %v157 = vunpack.c.l.b16 %v52
  %v158 = vunpack.c.l.b16 %v53
  %v159 = vunpack.c.l.b16 %v54
  %v160 = vunpack.c.l.b16 %v55
  %v161 = vunpack.c.l.b16 %v56
  %v162 = vunpack.c.l.b16 %v57
  %v163 = vunpack.c.l.b16 %v58
  %v164 = vunpack.c.l.b16 %v59
  %v165 = vunpack.c.l.b16 %v60
  %v166 = vunpack.c.l.b16 %v61
  %v167 = vunpack.c.l.b16 %v62
  %v168 = vunpack.c.l.b16 %v63
  %v169 = vunpack.c.l.b16 %v64
  %v170 = vpack.c.b16 %v122, %v121
  %v171 = vpack.c.b16 %v124, %v123
  %v172 = vpack.c.b16 %v126, %v125
  %v173 = vpack.c.b16 %v128, %v127
  %v174 = vpack.c.b16 %v130, %v129
  %v175 = vpack.c.b16 %v132, %v131
  %v176 = vpack.c.b16 %v134, %v133
  %v177 = vpack.c.b16 %v136, %v135
  %v178 = vpack.c.b16 %v138, %v137
  %v179 = vpack.c.b16 %v140, %v139
  %v180 = vpack.c.b16 %v142, %v141
  %v181 = vpack.c.b16 %v144, %v143
  %v182 = vpack.c.b16 %v146, %v145
  %v183 = vpack.c.b16 %v148, %v147
  %v184 = vpack.c.b16 %v150, %v149
  %v185 = vpack.c.b16 %v152, %v151
  %v186 = vpack.c.b16 %v154, %v153
  %v187 = vpack.c.b16 %v156, %v155
  %v188 = vpack.c.b16 %v158, %v157
  %v189 = vpack.c.b16 %v160, %v159
  %v190 = vpack.c.b16 %v162, %v161
  %v191 = vpack.c.b16 %v164, %v163
  %v192 = vpack.c.b16 %v166, %v165
  %v193 = vpack.c.b16 %v168, %v167
  %v194 = vpack.c.b16 %v169, %v169
  %v199 = vunpack.c.l.b16 %v65
  %v200 = vunpack.c.l.b16 %v66
  %v201 = vunpack.c.l.b16 %v67
  %v202 = vunpack.c.l.b16 %v68
  %v203 = vpack.c.b16 %v200, %v199
  %v204 = vpack.c.b16 %v202, %v201
  %vm206 = vcmask 203776
  %v208 = vsel %vm206, %v170, 0
  %v211 = vsel %vm206, %v171, 0
  %v214 = vsel %vm206, %v172, 0
  %v217 = vsel %vm206, %v173, 0
  %v220 = vsel %vm206, %v174, 0
  %v223 = vsel %vm206, %v175, 0
  %v226 = vsel %vm206, %v176, 0
  %v229 = vsel %vm206, %v177, 0
  %v232 = vsel %vm206, %v178, 0
  %v235 = vsel %vm206, %v179, 0
  %v238 = vsel %vm206, %v180, 0
  %v241 = vsel %vm206, %v181, 0
  %v244 = vsel %vm206, %v182, 0
  %v247 = vsel %vm206, %v183, 0
  %v250 = vsel %vm206, %v184, 0
  %v253 = vsel %vm206, %v185, 0
  %v256 = vsel %vm206, %v186, 0
  %v259 = vsel %vm206, %v187, 0
  %v262 = vsel %vm206, %v188, 0
  %v265 = vsel %vm206, %v189, 0
  %v268 = vsel %vm206, %v190, 0
  %v271 = vsel %vm206, %v191, 0
  %v274 = vsel %vm206, %v192, 0
  %v277 = vsel %vm206, %v193, 0
  %v280 = vsel %vm206, %v194, 0
  %vm282 = vcmask 1043456
  %vm283 = vcmask 1044480
  %v284 = vsel %vm282, 4294967295, 65535
  %v285 = vsel %vm283, %v284, 0
  %v287 = vand.u32 %v204, %v285
  %289 = vmatpush.bf16.msra.mxu0 0
  %290 = vmatpush.bf16.msra.mxu0 0
  %291 = vmatpush.bf16.msra.mxu0 0
  %292 = vmatpush.bf16.msra.mxu0 0
  %293 = vmatpush.bf16.msra.mxu0 0
  %294 = vmatpush.bf16.msra.mxu0 0
  %295 = vmatpush.bf16.msra.mxu0 %v287
  %296 = vmatpush.bf16.msra.mxu0 %v203
  %297 = vmatmul.bf16.gmra.mxu0 %v208
  %v298 = vpop.f32.mrf.mxu0
  %v299 = vadd.f32 %v70, %v298
  %v300 = vpop.f32.mrf.mxu0
  %v301 = vadd.f32 %v70, %v300
  %302 = vmatmul.bf16.gmra.mxu0 %v211
  %v303 = vpop.f32.mrf.mxu0
  %v304 = vadd.f32 %v70, %v303
  %v305 = vpop.f32.mrf.mxu0
  %v306 = vadd.f32 %v70, %v305
  %307 = vmatmul.bf16.gmra.mxu0 %v214
  %v308 = vpop.f32.mrf.mxu0
  %v309 = vadd.f32 %v70, %v308
  %v310 = vpop.f32.mrf.mxu0
  %v311 = vadd.f32 %v70, %v310
  %312 = vmatmul.bf16.gmra.mxu0 %v217
  %v313 = vpop.f32.mrf.mxu0
  %v314 = vadd.f32 %v70, %v313
  %v315 = vpop.f32.mrf.mxu0
  %v316 = vadd.f32 %v70, %v315
  %317 = vmatmul.bf16.gmra.mxu0 %v220
  %v318 = vpop.f32.mrf.mxu0
  %v319 = vadd.f32 %v70, %v318
  %v320 = vpop.f32.mrf.mxu0
  %v321 = vadd.f32 %v70, %v320
  %322 = vmatmul.bf16.gmra.mxu0 %v223
  %v323 = vpop.f32.mrf.mxu0
  %v324 = vadd.f32 %v70, %v323
  %v325 = vpop.f32.mrf.mxu0
  %v326 = vadd.f32 %v70, %v325
  %327 = vmatmul.bf16.gmra.mxu0 %v226
  %v328 = vpop.f32.mrf.mxu0
  %v329 = vadd.f32 %v70, %v328
  %v330 = vpop.f32.mrf.mxu0
  %v331 = vadd.f32 %v70, %v330
  %332 = vmatmul.bf16.gmra.mxu0 %v229
  %v333 = vpop.f32.mrf.mxu0
  %v334 = vadd.f32 %v70, %v333
  %v335 = vpop.f32.mrf.mxu0
  %v336 = vadd.f32 %v70, %v335
  %337 = vmatmul.bf16.gmra.mxu0 %v232
  %v338 = vpop.f32.mrf.mxu0
  %v339 = vadd.f32 %v70, %v338
  %v340 = vpop.f32.mrf.mxu0
  %v341 = vadd.f32 %v70, %v340
  %342 = vmatmul.bf16.gmra.mxu0 %v235
  %v343 = vpop.f32.mrf.mxu0
  %v344 = vadd.f32 %v70, %v343
  %v345 = vpop.f32.mrf.mxu0
  %v346 = vadd.f32 %v70, %v345
  %347 = vmatmul.bf16.gmra.mxu0 %v238
  %v348 = vpop.f32.mrf.mxu0
  %v349 = vadd.f32 %v70, %v348
  %v350 = vpop.f32.mrf.mxu0
  %v351 = vadd.f32 %v70, %v350
  %352 = vmatmul.bf16.gmra.mxu0 %v241
  %v353 = vpop.f32.mrf.mxu0
  %v354 = vadd.f32 %v70, %v353
  %v355 = vpop.f32.mrf.mxu0
  %v356 = vadd.f32 %v70, %v355
  %357 = vmatmul.bf16.gmra.mxu0 %v244
  %v358 = vpop.f32.mrf.mxu0
  %v359 = vadd.f32 %v70, %v358
  %v360 = vpop.f32.mrf.mxu0
  %v361 = vadd.f32 %v70, %v360
  %362 = vmatmul.bf16.gmra.mxu0 %v247
  %v363 = vpop.f32.mrf.mxu0
  %v364 = vadd.f32 %v70, %v363
  %v365 = vpop.f32.mrf.mxu0
  %v366 = vadd.f32 %v70, %v365
  %367 = vmatmul.bf16.gmra.mxu0 %v250
  %v368 = vpop.f32.mrf.mxu0
  %v369 = vadd.f32 %v70, %v368
  %v370 = vpop.f32.mrf.mxu0
  %v371 = vadd.f32 %v70, %v370
  %372 = vmatmul.bf16.gmra.mxu0 %v253
  %v373 = vpop.f32.mrf.mxu0
  %v374 = vadd.f32 %v70, %v373
  %v375 = vpop.f32.mrf.mxu0
  %v376 = vadd.f32 %v70, %v375
  %377 = vmatmul.bf16.gmra.mxu0 %v256
  %v378 = vpop.f32.mrf.mxu0
  %v379 = vadd.f32 %v70, %v378
  %v380 = vpop.f32.mrf.mxu0
  %v381 = vadd.f32 %v70, %v380
  %382 = vmatmul.bf16.gmra.mxu0 %v259
  %v383 = vpop.f32.mrf.mxu0
  %v384 = vadd.f32 %v70, %v383
  %v385 = vpop.f32.mrf.mxu0
  %v386 = vadd.f32 %v70, %v385
  %387 = vmatmul.bf16.gmra.mxu0 %v262
  %v388 = vpop.f32.mrf.mxu0
  %v389 = vadd.f32 %v70, %v388
  %v390 = vpop.f32.mrf.mxu0
  %v391 = vadd.f32 %v70, %v390
  %392 = vmatmul.bf16.gmra.mxu0 %v265
  %v393 = vpop.f32.mrf.mxu0
  %v394 = vadd.f32 %v70, %v393
  %v395 = vpop.f32.mrf.mxu0
  %v396 = vadd.f32 %v70, %v395
  %397 = vmatmul.bf16.gmra.mxu0 %v268
  %v398 = vpop.f32.mrf.mxu0
  %v399 = vadd.f32 %v70, %v398
  %v400 = vpop.f32.mrf.mxu0
  %v401 = vadd.f32 %v70, %v400
  %402 = vmatmul.bf16.gmra.mxu0 %v271
  %v403 = vpop.f32.mrf.mxu0
  %v404 = vadd.f32 %v70, %v403
  %v405 = vpop.f32.mrf.mxu0
  %v406 = vadd.f32 %v70, %v405
  %407 = vmatmul.bf16.gmra.mxu0 %v274
  %v408 = vpop.f32.mrf.mxu0
  %v409 = vadd.f32 %v70, %v408
  %v410 = vpop.f32.mrf.mxu0
  %v411 = vadd.f32 %v70, %v410
  %412 = vmatmul.bf16.gmra.mxu0 %v277
  %v413 = vpop.f32.mrf.mxu0
  %v414 = vadd.f32 %v70, %v413
  %v415 = vpop.f32.mrf.mxu0
  %v416 = vadd.f32 %v70, %v415
  %417 = vmatmul.bf16.gmra.mxu0 %v280
  %v418 = vpop.f32.mrf.mxu0
  %v419 = vadd.f32 %v70, %v418
  %v420 = vpop.f32.mrf.mxu0
  %421 = vdwg.mxu0
  %v422 = vmax.f32 %v299, 0.0
  %v423 = vmax.f32 %v301, 0.0
  %v424 = vmax.f32 %v304, 0.0
  %v425 = vmax.f32 %v306, 0.0
  %v426 = vmax.f32 %v309, 0.0
  %v427 = vmax.f32 %v311, 0.0
  %v428 = vmax.f32 %v314, 0.0
  %v429 = vmax.f32 %v316, 0.0
  %v430 = vmax.f32 %v319, 0.0
  %v431 = vmax.f32 %v321, 0.0
  %v432 = vmax.f32 %v324, 0.0
  %v433 = vmax.f32 %v326, 0.0
  %v434 = vmax.f32 %v329, 0.0
  %v435 = vmax.f32 %v331, 0.0
  %v436 = vmax.f32 %v334, 0.0
  %v437 = vmax.f32 %v336, 0.0
  %v438 = vmax.f32 %v339, 0.0
  %v439 = vmax.f32 %v341, 0.0
  %v440 = vmax.f32 %v344, 0.0
  %v441 = vmax.f32 %v346, 0.0
  %v442 = vmax.f32 %v349, 0.0
  %v443 = vmax.f32 %v351, 0.0
  %v444 = vmax.f32 %v354, 0.0
  %v445 = vmax.f32 %v356, 0.0
  %v446 = vmax.f32 %v359, 0.0
  %v447 = vmax.f32 %v361, 0.0
  %v448 = vmax.f32 %v364, 0.0
  %v449 = vmax.f32 %v366, 0.0
  %v450 = vmax.f32 %v369, 0.0
  %v451 = vmax.f32 %v371, 0.0
  %v452 = vmax.f32 %v374, 0.0
  %v453 = vmax.f32 %v376, 0.0
  %v454 = vmax.f32 %v379, 0.0
  %v455 = vmax.f32 %v381, 0.0
  %v456 = vmax.f32 %v384, 0.0
  %v457 = vmax.f32 %v386, 0.0
  %v458 = vmax.f32 %v389, 0.0
  %v459 = vmax.f32 %v391, 0.0
  %v460 = vmax.f32 %v394, 0.0
  %v461 = vmax.f32 %v396, 0.0
  %v462 = vmax.f32 %v399, 0.0
  %v463 = vmax.f32 %v401, 0.0
  %v464 = vmax.f32 %v404, 0.0
  %v465 = vmax.f32 %v406, 0.0
  %v466 = vmax.f32 %v409, 0.0
  %v467 = vmax.f32 %v411, 0.0
  %v468 = vmax.f32 %v414, 0.0
  %v469 = vmax.f32 %v416, 0.0
  %v470 = vmax.f32 %v419, 0.0
  %s471 = scalar_lea.vmem %s0, 196
  %v472 = vld [vmem:[%s471] sm:$0xf]
  %v473 = vld [vmem:[%s471 + $0x4] sm:$0xf]
  %v474 = vld [vmem:[%s471 + $0x8] sm:$0xf]
  %v475 = vld [vmem:[%s471 + $0xc] sm:$0xf]
  %v476 = vld [vmem:[%s471 + $0x10] sm:$0xf]
  %v477 = vld [vmem:[%s471 + $0x14] sm:$0xf]
  %v478 = vld [vmem:[%s471 + $0x18] sm:$0xf]
  %v479 = vld [vmem:[%s471 + $0x1c] sm:$0xf]
  %v480 = vld [vmem:[%s471 + $0x20] sm:$0xf]
  %v481 = vld [vmem:[%s471 + $0x24] sm:$0xf]
  %v482 = vld [vmem:[%s471 + $0x28] sm:$0xf]
  %v483 = vld [vmem:[%s471 + $0x2c] sm:$0xf]
  %v484 = vld [vmem:[%s471 + $0x30] sm:$0xf]
  %v485 = vld [vmem:[%s471 + $0x34] sm:$0xf]
  %v486 = vld [vmem:[%s471 + $0x38] sm:$0xf]
  %v487 = vld [vmem:[%s471 + $0x3c] sm:$0xf]
  %v488 = vld [vmem:[%s471 + $0x40] sm:$0xf]
  %v489 = vld [vmem:[%s471 + $0x44] sm:$0xf]
  %v490 = vld [vmem:[%s471 + $0x48] sm:$0xf]
  %v491 = vld [vmem:[%s471 + $0x4c] sm:$0xf]
  %v492 = vld [vmem:[%s471 + $0x50] sm:$0xf]
  %v493 = vld [vmem:[%s471 + $0x54] sm:$0xf]
  %v494 = vld [vmem:[%s471 + $0x58] sm:$0xf]
  %v495 = vld [vmem:[%s471 + $0x5c] sm:$0xf]
  %v496 = vld [vmem:[%s471 + $0x60] sm:$0xf]
  %v497 = vld [vmem:[%s471 + $0x64] sm:$0xf]
  %v498 = vld [vmem:[%s471 + $0x68] sm:$0xf]
  %v499 = vld [vmem:[%s471 + $0x6c] sm:$0xf]
  %v500 = vld [vmem:[%s471 + $0x70] sm:$0xf]
  %v501 = vld [vmem:[%s471 + $0x74] sm:$0xf]
  %v502 = vld [vmem:[%s471 + $0x78] sm:$0xf]
  %v503 = vld [vmem:[%s471 + $0x7c] sm:$0xf]
  %v504 = vld [vmem:[%s471 + $0x80] sm:$0xf]
  %v505 = vld [vmem:[%s471 + $0x84] sm:$0xf]
  %v506 = vld [vmem:[%s471 + $0x88] sm:$0xf]
  %v507 = vld [vmem:[%s471 + $0x8c] sm:$0xf]
  %v508 = vld [vmem:[%s471 + $0x90] sm:$0xf]
  %v509 = vld [vmem:[%s471 + $0x94] sm:$0xf]
  %v510 = vld [vmem:[%s471 + $0x98] sm:$0xf]
  %v511 = vld [vmem:[%s471 + $0x9c] sm:$0xf]
  %v512 = vld [vmem:[%s471 + $0xa0] sm:$0xf]
  %v513 = vld [vmem:[%s471 + $0xa4] sm:$0xf]
  %v514 = vld [vmem:[%s471 + $0xa8] sm:$0xf]
  %v515 = vld [vmem:[%s471 + $0xac] sm:$0xf]
  %v516 = vld [vmem:[%s471 + $0xb0] sm:$0xf]
  %v517 = vld [vmem:[%s471 + $0xb4] sm:$0xf]
  %v518 = vld [vmem:[%s471 + $0xb8] sm:$0xf]
  %v519 = vld [vmem:[%s471 + $0xbc] sm:$0xf]
  %v520 = vld [vmem:[%s471 + $0xc0] sm:$0xf]
  %v570 = vunpack.c.l.b16 %v472
  %v571 = vunpack.c.l.b16 %v473
  %v572 = vunpack.c.l.b16 %v474
  %v573 = vunpack.c.l.b16 %v475
  %v574 = vunpack.c.l.b16 %v476
  %v575 = vunpack.c.l.b16 %v477
  %v576 = vunpack.c.l.b16 %v478
  %v577 = vunpack.c.l.b16 %v479
  %v578 = vunpack.c.l.b16 %v480
  %v579 = vunpack.c.l.b16 %v481
  %v580 = vunpack.c.l.b16 %v482
  %v581 = vunpack.c.l.b16 %v483
  %v582 = vunpack.c.l.b16 %v484
  %v583 = vunpack.c.l.b16 %v485
  %v584 = vunpack.c.l.b16 %v486
  %v585 = vunpack.c.l.b16 %v487
  %v586 = vunpack.c.l.b16 %v488
  %v587 = vunpack.c.l.b16 %v489
  %v588 = vunpack.c.l.b16 %v490
  %v589 = vunpack.c.l.b16 %v491
  %v590 = vunpack.c.l.b16 %v492
  %v591 = vunpack.c.l.b16 %v493
  %v592 = vunpack.c.l.b16 %v494
  %v593 = vunpack.c.l.b16 %v495
  %v594 = vunpack.c.l.b16 %v496
  %v595 = vunpack.c.l.b16 %v497
  %v596 = vunpack.c.l.b16 %v498
  %v597 = vunpack.c.l.b16 %v499
  %v598 = vunpack.c.l.b16 %v500
  %v599 = vunpack.c.l.b16 %v501
  %v600 = vunpack.c.l.b16 %v502
  %v601 = vunpack.c.l.b16 %v503
  %v602 = vunpack.c.l.b16 %v504
  %v603 = vunpack.c.l.b16 %v505
  %v604 = vunpack.c.l.b16 %v506
  %v605 = vunpack.c.l.b16 %v507
  %v606 = vunpack.c.l.b16 %v508
  %v607 = vunpack.c.l.b16 %v509
  %v608 = vunpack.c.l.b16 %v510
  %v609 = vunpack.c.l.b16 %v511
  %v610 = vunpack.c.l.b16 %v512
  %v611 = vunpack.c.l.b16 %v513
  %v612 = vunpack.c.l.b16 %v514
  %v613 = vunpack.c.l.b16 %v515
  %v614 = vunpack.c.l.b16 %v516
  %v615 = vunpack.c.l.b16 %v517
  %v616 = vunpack.c.l.b16 %v518
  %v617 = vunpack.c.l.b16 %v519
  %v618 = vunpack.c.l.b16 %v520
  %v619 = vpack.c.b16 %v571, %v570
  %v620 = vpack.c.b16 %v573, %v572
  %v621 = vpack.c.b16 %v575, %v574
  %v622 = vpack.c.b16 %v577, %v576
  %v623 = vpack.c.b16 %v579, %v578
  %v624 = vpack.c.b16 %v581, %v580
  %v625 = vpack.c.b16 %v583, %v582
  %v626 = vpack.c.b16 %v585, %v584
  %v627 = vpack.c.b16 %v587, %v586
  %v628 = vpack.c.b16 %v589, %v588
  %v629 = vpack.c.b16 %v591, %v590
  %v630 = vpack.c.b16 %v593, %v592
  %v631 = vpack.c.b16 %v595, %v594
  %v632 = vpack.c.b16 %v597, %v596
  %v633 = vpack.c.b16 %v599, %v598
  %v634 = vpack.c.b16 %v601, %v600
  %v635 = vpack.c.b16 %v603, %v602
  %v636 = vpack.c.b16 %v605, %v604
  %v637 = vpack.c.b16 %v607, %v606
  %v638 = vpack.c.b16 %v609, %v608
  %v639 = vpack.c.b16 %v611, %v610
  %v640 = vpack.c.b16 %v613, %v612
  %v641 = vpack.c.b16 %v615, %v614
  %v642 = vpack.c.b16 %v617, %v616
  %v643 = vpack.c.b16 %v618, %v618
  %v645 = vsel %vm206, %v619, 0
  %v648 = vsel %vm206, %v620, 0
  %v651 = vsel %vm206, %v621, 0
  %v654 = vsel %vm206, %v622, 0
  %v657 = vsel %vm206, %v623, 0
  %v660 = vsel %vm206, %v624, 0
  %v663 = vsel %vm206, %v625, 0
  %v666 = vsel %vm206, %v626, 0
  %v669 = vsel %vm206, %v627, 0
  %v672 = vsel %vm206, %v628, 0
  %v675 = vsel %vm206, %v629, 0
  %v678 = vsel %vm206, %v630, 0
  %v681 = vsel %vm206, %v631, 0
  %v684 = vsel %vm206, %v632, 0
  %v687 = vsel %vm206, %v633, 0
  %v690 = vsel %vm206, %v634, 0
  %v693 = vsel %vm206, %v635, 0
  %v696 = vsel %vm206, %v636, 0
  %v699 = vsel %vm206, %v637, 0
  %v702 = vsel %vm206, %v638, 0
  %v705 = vsel %vm206, %v639, 0
  %v708 = vsel %vm206, %v640, 0
  %v711 = vsel %vm206, %v641, 0
  %v714 = vsel %vm206, %v642, 0
  %v717 = vsel %vm206, %v643, 0
  %719 = vmatpush.bf16.msra.mxu0 0
  %720 = vmatpush.bf16.msra.mxu0 0
  %721 = vmatpush.bf16.msra.mxu0 0
  %722 = vmatpush.bf16.msra.mxu0 0
  %723 = vmatpush.bf16.msra.mxu0 0
  %724 = vmatpush.bf16.msra.mxu0 0
  %725 = vmatpush.bf16.msra.mxu0 %v287
  %726 = vmatpush.bf16.msra.mxu0 %v203
  %727 = vmatmul.bf16.gmra.mxu0 %v645
  %v728 = vpop.f32.mrf.mxu0
  %v729 = vadd.f32 %v70, %v728
  %v730 = vpop.f32.mrf.mxu0
  %v731 = vadd.f32 %v70, %v730
  %732 = vmatmul.bf16.gmra.mxu0 %v648
  %v733 = vpop.f32.mrf.mxu0
  %v734 = vadd.f32 %v70, %v733
  %v735 = vpop.f32.mrf.mxu0
  %v736 = vadd.f32 %v70, %v735
  %737 = vmatmul.bf16.gmra.mxu0 %v651
  %v738 = vpop.f32.mrf.mxu0
  %v739 = vadd.f32 %v70, %v738
  %v740 = vpop.f32.mrf.mxu0
  %v741 = vadd.f32 %v70, %v740
  %742 = vmatmul.bf16.gmra.mxu0 %v654
  %v743 = vpop.f32.mrf.mxu0
  %v744 = vadd.f32 %v70, %v743
  %v745 = vpop.f32.mrf.mxu0
  %v746 = vadd.f32 %v70, %v745
  %747 = vmatmul.bf16.gmra.mxu0 %v657
  %v748 = vpop.f32.mrf.mxu0
  %v749 = vadd.f32 %v70, %v748
  %v750 = vpop.f32.mrf.mxu0
  %v751 = vadd.f32 %v70, %v750
  %752 = vmatmul.bf16.gmra.mxu0 %v660
  %v753 = vpop.f32.mrf.mxu0
  %v754 = vadd.f32 %v70, %v753
  %v755 = vpop.f32.mrf.mxu0
  %v756 = vadd.f32 %v70, %v755
  %757 = vmatmul.bf16.gmra.mxu0 %v663
  %v758 = vpop.f32.mrf.mxu0
  %v759 = vadd.f32 %v70, %v758
  %v760 = vpop.f32.mrf.mxu0
  %v761 = vadd.f32 %v70, %v760
  %762 = vmatmul.bf16.gmra.mxu0 %v666
  %v763 = vpop.f32.mrf.mxu0
  %v764 = vadd.f32 %v70, %v763
  %v765 = vpop.f32.mrf.mxu0
  %v766 = vadd.f32 %v70, %v765
  %767 = vmatmul.bf16.gmra.mxu0 %v669
  %v768 = vpop.f32.mrf.mxu0
  %v769 = vadd.f32 %v70, %v768
  %v770 = vpop.f32.mrf.mxu0
  %v771 = vadd.f32 %v70, %v770
  %772 = vmatmul.bf16.gmra.mxu0 %v672
  %v773 = vpop.f32.mrf.mxu0
  %v774 = vadd.f32 %v70, %v773
  %v775 = vpop.f32.mrf.mxu0
  %v776 = vadd.f32 %v70, %v775
  %777 = vmatmul.bf16.gmra.mxu0 %v675
  %v778 = vpop.f32.mrf.mxu0
  %v779 = vadd.f32 %v70, %v778
  %v780 = vpop.f32.mrf.mxu0
  %v781 = vadd.f32 %v70, %v780
  %782 = vmatmul.bf16.gmra.mxu0 %v678
  %v783 = vpop.f32.mrf.mxu0
  %v784 = vadd.f32 %v70, %v783
  %v785 = vpop.f32.mrf.mxu0
  %v786 = vadd.f32 %v70, %v785
  %787 = vmatmul.bf16.gmra.mxu0 %v681
  %v788 = vpop.f32.mrf.mxu0
  %v789 = vadd.f32 %v70, %v788
  %v790 = vpop.f32.mrf.mxu0
  %v791 = vadd.f32 %v70, %v790
  %792 = vmatmul.bf16.gmra.mxu0 %v684
  %v793 = vpop.f32.mrf.mxu0
  %v794 = vadd.f32 %v70, %v793
  %v795 = vpop.f32.mrf.mxu0
  %v796 = vadd.f32 %v70, %v795
  %797 = vmatmul.bf16.gmra.mxu0 %v687
  %v798 = vpop.f32.mrf.mxu0
  %v799 = vadd.f32 %v70, %v798
  %v800 = vpop.f32.mrf.mxu0
  %v801 = vadd.f32 %v70, %v800
  %802 = vmatmul.bf16.gmra.mxu0 %v690
  %v803 = vpop.f32.mrf.mxu0
  %v804 = vadd.f32 %v70, %v803
  %v805 = vpop.f32.mrf.mxu0
  %v806 = vadd.f32 %v70, %v805
  %807 = vmatmul.bf16.gmra.mxu0 %v693
  %v808 = vpop.f32.mrf.mxu0
  %v809 = vadd.f32 %v70, %v808
  %v810 = vpop.f32.mrf.mxu0
  %v811 = vadd.f32 %v70, %v810
  %812 = vmatmul.bf16.gmra.mxu0 %v696
  %v813 = vpop.f32.mrf.mxu0
  %v814 = vadd.f32 %v70, %v813
  %v815 = vpop.f32.mrf.mxu0
  %v816 = vadd.f32 %v70, %v815
  %817 = vmatmul.bf16.gmra.mxu0 %v699
  %v818 = vpop.f32.mrf.mxu0
  %v819 = vadd.f32 %v70, %v818
  %v820 = vpop.f32.mrf.mxu0
  %v821 = vadd.f32 %v70, %v820
  %822 = vmatmul.bf16.gmra.mxu0 %v702
  %v823 = vpop.f32.mrf.mxu0
  %v824 = vadd.f32 %v70, %v823
  %v825 = vpop.f32.mrf.mxu0
  %v826 = vadd.f32 %v70, %v825
  %827 = vmatmul.bf16.gmra.mxu0 %v705
  %v828 = vpop.f32.mrf.mxu0
  %v829 = vadd.f32 %v70, %v828
  %v830 = vpop.f32.mrf.mxu0
  %v831 = vadd.f32 %v70, %v830
  %832 = vmatmul.bf16.gmra.mxu0 %v708
  %v833 = vpop.f32.mrf.mxu0
  %v834 = vadd.f32 %v70, %v833
  %v835 = vpop.f32.mrf.mxu0
  %v836 = vadd.f32 %v70, %v835
  %837 = vmatmul.bf16.gmra.mxu0 %v711
  %v838 = vpop.f32.mrf.mxu0
  %v839 = vadd.f32 %v70, %v838
  %v840 = vpop.f32.mrf.mxu0
  %v841 = vadd.f32 %v70, %v840
  %842 = vmatmul.bf16.gmra.mxu0 %v714
  %v843 = vpop.f32.mrf.mxu0
  %v844 = vadd.f32 %v70, %v843
  %v845 = vpop.f32.mrf.mxu0
  %v846 = vadd.f32 %v70, %v845
  %847 = vmatmul.bf16.gmra.mxu0 %v717
  %v848 = vpop.f32.mrf.mxu0
  %v849 = vadd.f32 %v70, %v848
  %v850 = vpop.f32.mrf.mxu0
  %851 = vdwg.mxu0
  %v852 = vmax.f32 %v729, 0.0
  %v853 = vmax.f32 %v731, 0.0
  %v854 = vmax.f32 %v734, 0.0
  %v855 = vmax.f32 %v736, 0.0
  %v856 = vmax.f32 %v739, 0.0
  %v857 = vmax.f32 %v741, 0.0
  %v858 = vmax.f32 %v744, 0.0
  %v859 = vmax.f32 %v746, 0.0
  %v860 = vmax.f32 %v749, 0.0
  %v861 = vmax.f32 %v751, 0.0
  %v862 = vmax.f32 %v754, 0.0
  %v863 = vmax.f32 %v756, 0.0
  %v864 = vmax.f32 %v759, 0.0
  %v865 = vmax.f32 %v761, 0.0
  %v866 = vmax.f32 %v764, 0.0
  %v867 = vmax.f32 %v766, 0.0
  %v868 = vmax.f32 %v769, 0.0
  %v869 = vmax.f32 %v771, 0.0
  %v870 = vmax.f32 %v774, 0.0
  %v871 = vmax.f32 %v776, 0.0
  %v872 = vmax.f32 %v779, 0.0
  %v873 = vmax.f32 %v781, 0.0
  %v874 = vmax.f32 %v784, 0.0
  %v875 = vmax.f32 %v786, 0.0
  %v876 = vmax.f32 %v789, 0.0
  %v877 = vmax.f32 %v791, 0.0
  %v878 = vmax.f32 %v794, 0.0
  %v879 = vmax.f32 %v796, 0.0
  %v880 = vmax.f32 %v799, 0.0
  %v881 = vmax.f32 %v801, 0.0
  %v882 = vmax.f32 %v804, 0.0
  %v883 = vmax.f32 %v806, 0.0
  %v884 = vmax.f32 %v809, 0.0
  %v885 = vmax.f32 %v811, 0.0
  %v886 = vmax.f32 %v814, 0.0
  %v887 = vmax.f32 %v816, 0.0
  %v888 = vmax.f32 %v819, 0.0
  %v889 = vmax.f32 %v821, 0.0
  %v890 = vmax.f32 %v824, 0.0
  %v891 = vmax.f32 %v826, 0.0
  %v892 = vmax.f32 %v829, 0.0
  %v893 = vmax.f32 %v831, 0.0
  %v894 = vmax.f32 %v834, 0.0
  %v895 = vmax.f32 %v836, 0.0
  %v896 = vmax.f32 %v839, 0.0
  %v897 = vmax.f32 %v841, 0.0
  %v898 = vmax.f32 %v844, 0.0
  %v899 = vmax.f32 %v846, 0.0
  %v900 = vmax.f32 %v849, 0.0
  %v901 = vmax.f32 %v422, %v852
  %v902 = vmax.f32 %v423, %v853
  %v903 = vmax.f32 %v424, %v854
  %v904 = vmax.f32 %v425, %v855
  %v905 = vmax.f32 %v426, %v856
  %v906 = vmax.f32 %v427, %v857
  %v907 = vmax.f32 %v428, %v858
  %v908 = vmax.f32 %v429, %v859
  %v909 = vmax.f32 %v430, %v860
  %v910 = vmax.f32 %v431, %v861
  %v911 = vmax.f32 %v432, %v862
  %v912 = vmax.f32 %v433, %v863
  %v913 = vmax.f32 %v434, %v864
  %v914 = vmax.f32 %v435, %v865
  %v915 = vmax.f32 %v436, %v866
  %v916 = vmax.f32 %v437, %v867
  %v917 = vmax.f32 %v438, %v868
  %v918 = vmax.f32 %v439, %v869
  %v919 = vmax.f32 %v440, %v870
  %v920 = vmax.f32 %v441, %v871
  %v921 = vmax.f32 %v442, %v872
  %v922 = vmax.f32 %v443, %v873
  %v923 = vmax.f32 %v444, %v874
  %v924 = vmax.f32 %v445, %v875
  %v925 = vmax.f32 %v446, %v876
  %v926 = vmax.f32 %v447, %v877
  %v927 = vmax.f32 %v448, %v878
  %v928 = vmax.f32 %v449, %v879
  %v929 = vmax.f32 %v450, %v880
  %v930 = vmax.f32 %v451, %v881
  %v931 = vmax.f32 %v452, %v882
  %v932 = vmax.f32 %v453, %v883
  %v933 = vmax.f32 %v454, %v884
  %v934 = vmax.f32 %v455, %v885
  %v935 = vmax.f32 %v456, %v886
  %v936 = vmax.f32 %v457, %v887
  %v937 = vmax.f32 %v458, %v888
  %v938 = vmax.f32 %v459, %v889
  %v939 = vmax.f32 %v460, %v890
  %v940 = vmax.f32 %v461, %v891
  %v941 = vmax.f32 %v462, %v892
  %v942 = vmax.f32 %v463, %v893
  %v943 = vmax.f32 %v464, %v894
  %v944 = vmax.f32 %v465, %v895
  %v945 = vmax.f32 %v466, %v896
  %v946 = vmax.f32 %v467, %v897
  %v947 = vmax.f32 %v468, %v898
  %v948 = vmax.f32 %v469, %v899
  %v949 = vmax.f32 %v470, %v900
  %s950 = scalar_lea.vmem %s0, 392
  %v951 = vld [vmem:[%s950] sm:$0xf]
  %v952 = vld [vmem:[%s950 + $0x4] sm:$0xf]
  %v953 = vld [vmem:[%s950 + $0x8] sm:$0xf]
  %v954 = vld [vmem:[%s950 + $0xc] sm:$0xf]
  %v955 = vld [vmem:[%s950 + $0x10] sm:$0xf]
  %v956 = vld [vmem:[%s950 + $0x14] sm:$0xf]
  %v957 = vld [vmem:[%s950 + $0x18] sm:$0xf]
  %v958 = vld [vmem:[%s950 + $0x1c] sm:$0xf]
  %v959 = vld [vmem:[%s950 + $0x20] sm:$0xf]
  %v960 = vld [vmem:[%s950 + $0x24] sm:$0xf]
  %v961 = vld [vmem:[%s950 + $0x28] sm:$0xf]
  %v962 = vld [vmem:[%s950 + $0x2c] sm:$0xf]
  %v963 = vld [vmem:[%s950 + $0x30] sm:$0xf]
  %v964 = vld [vmem:[%s950 + $0x34] sm:$0xf]
  %v965 = vld [vmem:[%s950 + $0x38] sm:$0xf]
  %v966 = vld [vmem:[%s950 + $0x3c] sm:$0xf]
  %v967 = vld [vmem:[%s950 + $0x40] sm:$0xf]
  %v968 = vld [vmem:[%s950 + $0x44] sm:$0xf]
  %v969 = vld [vmem:[%s950 + $0x48] sm:$0xf]
  %v970 = vld [vmem:[%s950 + $0x4c] sm:$0xf]
  %v971 = vld [vmem:[%s950 + $0x50] sm:$0xf]
  %v972 = vld [vmem:[%s950 + $0x54] sm:$0xf]
  %v973 = vld [vmem:[%s950 + $0x58] sm:$0xf]
  %v974 = vld [vmem:[%s950 + $0x5c] sm:$0xf]
  %v975 = vld [vmem:[%s950 + $0x60] sm:$0xf]
  %v976 = vld [vmem:[%s950 + $0x64] sm:$0xf]
  %v977 = vld [vmem:[%s950 + $0x68] sm:$0xf]
  %v978 = vld [vmem:[%s950 + $0x6c] sm:$0xf]
  %v979 = vld [vmem:[%s950 + $0x70] sm:$0xf]
  %v980 = vld [vmem:[%s950 + $0x74] sm:$0xf]
  %v981 = vld [vmem:[%s950 + $0x78] sm:$0xf]
  %v982 = vld [vmem:[%s950 + $0x7c] sm:$0xf]
  %v983 = vld [vmem:[%s950 + $0x80] sm:$0xf]
  %v984 = vld [vmem:[%s950 + $0x84] sm:$0xf]
  %v985 = vld [vmem:[%s950 + $0x88] sm:$0xf]
  %v986 = vld [vmem:[%s950 + $0x8c] sm:$0xf]
  %v987 = vld [vmem:[%s950 + $0x90] sm:$0xf]
  %v988 = vld [vmem:[%s950 + $0x94] sm:$0xf]
  %v989 = vld [vmem:[%s950 + $0x98] sm:$0xf]
  %v990 = vld [vmem:[%s950 + $0x9c] sm:$0xf]
  %v991 = vld [vmem:[%s950 + $0xa0] sm:$0xf]
  %v992 = vld [vmem:[%s950 + $0xa4] sm:$0xf]
  %v993 = vld [vmem:[%s950 + $0xa8] sm:$0xf]
  %v994 = vld [vmem:[%s950 + $0xac] sm:$0xf]
  %v995 = vld [vmem:[%s950 + $0xb0] sm:$0xf]
  %v996 = vld [vmem:[%s950 + $0xb4] sm:$0xf]
  %v997 = vld [vmem:[%s950 + $0xb8] sm:$0xf]
  %v998 = vld [vmem:[%s950 + $0xbc] sm:$0xf]
  %v999 = vld [vmem:[%s950 + $0xc0] sm:$0xf]
  %v1049 = vunpack.c.l.b16 %v951
  %v1050 = vunpack.c.l.b16 %v952
  %v1051 = vunpack.c.l.b16 %v953
  %v1052 = vunpack.c.l.b16 %v954
  %v1053 = vunpack.c.l.b16 %v955
  %v1054 = vunpack.c.l.b16 %v956
  %v1055 = vunpack.c.l.b16 %v957
  %v1056 = vunpack.c.l.b16 %v958
  %v1057 = vunpack.c.l.b16 %v959
  %v1058 = vunpack.c.l.b16 %v960
  %v1059 = vunpack.c.l.b16 %v961
  %v1060 = vunpack.c.l.b16 %v962
  %v1061 = vunpack.c.l.b16 %v963
  %v1062 = vunpack.c.l.b16 %v964
  %v1063 = vunpack.c.l.b16 %v965
  %v1064 = vunpack.c.l.b16 %v966
  %v1065 = vunpack.c.l.b16 %v967
  %v1066 = vunpack.c.l.b16 %v968
  %v1067 = vunpack.c.l.b16 %v969
  %v1068 = vunpack.c.l.b16 %v970
  %v1069 = vunpack.c.l.b16 %v971
  %v1070 = vunpack.c.l.b16 %v972
  %v1071 = vunpack.c.l.b16 %v973
  %v1072 = vunpack.c.l.b16 %v974
  %v1073 = vunpack.c.l.b16 %v975
  %v1074 = vunpack.c.l.b16 %v976
  %v1075 = vunpack.c.l.b16 %v977
  %v1076 = vunpack.c.l.b16 %v978
  %v1077 = vunpack.c.l.b16 %v979
  %v1078 = vunpack.c.l.b16 %v980
  %v1079 = vunpack.c.l.b16 %v981
  %v1080 = vunpack.c.l.b16 %v982
  %v1081 = vunpack.c.l.b16 %v983
  %v1082 = vunpack.c.l.b16 %v984
  %v1083 = vunpack.c.l.b16 %v985
  %v1084 = vunpack.c.l.b16 %v986
  %v1085 = vunpack.c.l.b16 %v987
  %v1086 = vunpack.c.l.b16 %v988
  %v1087 = vunpack.c.l.b16 %v989
  %v1088 = vunpack.c.l.b16 %v990
  %v1089 = vunpack.c.l.b16 %v991
  %v1090 = vunpack.c.l.b16 %v992
  %v1091 = vunpack.c.l.b16 %v993
  %v1092 = vunpack.c.l.b16 %v994
  %v1093 = vunpack.c.l.b16 %v995
  %v1094 = vunpack.c.l.b16 %v996
  %v1095 = vunpack.c.l.b16 %v997
  %v1096 = vunpack.c.l.b16 %v998
  %v1097 = vunpack.c.l.b16 %v999
  %v1098 = vpack.c.b16 %v1050, %v1049
  %v1099 = vpack.c.b16 %v1052, %v1051
  %v1100 = vpack.c.b16 %v1054, %v1053
  %v1101 = vpack.c.b16 %v1056, %v1055
  %v1102 = vpack.c.b16 %v1058, %v1057
  %v1103 = vpack.c.b16 %v1060, %v1059
  %v1104 = vpack.c.b16 %v1062, %v1061
  %v1105 = vpack.c.b16 %v1064, %v1063
  %v1106 = vpack.c.b16 %v1066, %v1065
  %v1107 = vpack.c.b16 %v1068, %v1067
  %v1108 = vpack.c.b16 %v1070, %v1069
  %v1109 = vpack.c.b16 %v1072, %v1071
  %v1110 = vpack.c.b16 %v1074, %v1073
  %v1111 = vpack.c.b16 %v1076, %v1075
  %v1112 = vpack.c.b16 %v1078, %v1077
  %v1113 = vpack.c.b16 %v1080, %v1079
  %v1114 = vpack.c.b16 %v1082, %v1081
  %v1115 = vpack.c.b16 %v1084, %v1083
  %v1116 = vpack.c.b16 %v1086, %v1085
  %v1117 = vpack.c.b16 %v1088, %v1087
  %v1118 = vpack.c.b16 %v1090, %v1089
  %v1119 = vpack.c.b16 %v1092, %v1091
  %v1120 = vpack.c.b16 %v1094, %v1093
  %v1121 = vpack.c.b16 %v1096, %v1095
  %v1122 = vpack.c.b16 %v1097, %v1097
  %v1124 = vsel %vm206, %v1098, 0
  %v1127 = vsel %vm206, %v1099, 0
  %v1130 = vsel %vm206, %v1100, 0
  %v1133 = vsel %vm206, %v1101, 0
  %v1136 = vsel %vm206, %v1102, 0
  %v1139 = vsel %vm206, %v1103, 0
  %v1142 = vsel %vm206, %v1104, 0
  %v1145 = vsel %vm206, %v1105, 0
  %v1148 = vsel %vm206, %v1106, 0
  %v1151 = vsel %vm206, %v1107, 0
  %v1154 = vsel %vm206, %v1108, 0
  %v1157 = vsel %vm206, %v1109, 0
  %v1160 = vsel %vm206, %v1110, 0
  %v1163 = vsel %vm206, %v1111, 0
  %v1166 = vsel %vm206, %v1112, 0
  %v1169 = vsel %vm206, %v1113, 0
  %v1172 = vsel %vm206, %v1114, 0
  %v1175 = vsel %vm206, %v1115, 0
  %v1178 = vsel %vm206, %v1116, 0
  %v1181 = vsel %vm206, %v1117, 0
  %v1184 = vsel %vm206, %v1118, 0
  %v1187 = vsel %vm206, %v1119, 0
  %v1190 = vsel %vm206, %v1120, 0
  %v1193 = vsel %vm206, %v1121, 0
  %v1196 = vsel %vm206, %v1122, 0
  %1198 = vmatpush.bf16.msra.mxu0 0
  %1199 = vmatpush.bf16.msra.mxu0 0
  %1200 = vmatpush.bf16.msra.mxu0 0
  %1201 = vmatpush.bf16.msra.mxu0 0
  %1202 = vmatpush.bf16.msra.mxu0 0
  %1203 = vmatpush.bf16.msra.mxu0 0
  %1204 = vmatpush.bf16.msra.mxu0 %v287
  %1205 = vmatpush.bf16.msra.mxu0 %v203
  %1206 = vmatmul.bf16.gmra.mxu0 %v1124
  %v1207 = vpop.f32.mrf.mxu0
  %v1208 = vadd.f32 %v70, %v1207
  %v1209 = vpop.f32.mrf.mxu0
  %v1210 = vadd.f32 %v70, %v1209
  %1211 = vmatmul.bf16.gmra.mxu0 %v1127
  %v1212 = vpop.f32.mrf.mxu0
  %v1213 = vadd.f32 %v70, %v1212
  %v1214 = vpop.f32.mrf.mxu0
  %v1215 = vadd.f32 %v70, %v1214
  %1216 = vmatmul.bf16.gmra.mxu0 %v1130
  %v1217 = vpop.f32.mrf.mxu0
  %v1218 = vadd.f32 %v70, %v1217
  %v1219 = vpop.f32.mrf.mxu0
  %v1220 = vadd.f32 %v70, %v1219
  %1221 = vmatmul.bf16.gmra.mxu0 %v1133
  %v1222 = vpop.f32.mrf.mxu0
  %v1223 = vadd.f32 %v70, %v1222
  %v1224 = vpop.f32.mrf.mxu0
  %v1225 = vadd.f32 %v70, %v1224
  %1226 = vmatmul.bf16.gmra.mxu0 %v1136
  %v1227 = vpop.f32.mrf.mxu0
  %v1228 = vadd.f32 %v70, %v1227
  %v1229 = vpop.f32.mrf.mxu0
  %v1230 = vadd.f32 %v70, %v1229
  %1231 = vmatmul.bf16.gmra.mxu0 %v1139
  %v1232 = vpop.f32.mrf.mxu0
  %v1233 = vadd.f32 %v70, %v1232
  %v1234 = vpop.f32.mrf.mxu0
  %v1235 = vadd.f32 %v70, %v1234
  %1236 = vmatmul.bf16.gmra.mxu0 %v1142
  %v1237 = vpop.f32.mrf.mxu0
  %v1238 = vadd.f32 %v70, %v1237
  %v1239 = vpop.f32.mrf.mxu0
  %v1240 = vadd.f32 %v70, %v1239
  %1241 = vmatmul.bf16.gmra.mxu0 %v1145
  %v1242 = vpop.f32.mrf.mxu0
  %v1243 = vadd.f32 %v70, %v1242
  %v1244 = vpop.f32.mrf.mxu0
  %v1245 = vadd.f32 %v70, %v1244
  %1246 = vmatmul.bf16.gmra.mxu0 %v1148
  %v1247 = vpop.f32.mrf.mxu0
  %v1248 = vadd.f32 %v70, %v1247
  %v1249 = vpop.f32.mrf.mxu0
  %v1250 = vadd.f32 %v70, %v1249
  %1251 = vmatmul.bf16.gmra.mxu0 %v1151
  %v1252 = vpop.f32.mrf.mxu0
  %v1253 = vadd.f32 %v70, %v1252
  %v1254 = vpop.f32.mrf.mxu0
  %v1255 = vadd.f32 %v70, %v1254
  %1256 = vmatmul.bf16.gmra.mxu0 %v1154
  %v1257 = vpop.f32.mrf.mxu0
  %v1258 = vadd.f32 %v70, %v1257
  %v1259 = vpop.f32.mrf.mxu0
  %v1260 = vadd.f32 %v70, %v1259
  %1261 = vmatmul.bf16.gmra.mxu0 %v1157
  %v1262 = vpop.f32.mrf.mxu0
  %v1263 = vadd.f32 %v70, %v1262
  %v1264 = vpop.f32.mrf.mxu0
  %v1265 = vadd.f32 %v70, %v1264
  %1266 = vmatmul.bf16.gmra.mxu0 %v1160
  %v1267 = vpop.f32.mrf.mxu0
  %v1268 = vadd.f32 %v70, %v1267
  %v1269 = vpop.f32.mrf.mxu0
  %v1270 = vadd.f32 %v70, %v1269
  %1271 = vmatmul.bf16.gmra.mxu0 %v1163
  %v1272 = vpop.f32.mrf.mxu0
  %v1273 = vadd.f32 %v70, %v1272
  %v1274 = vpop.f32.mrf.mxu0
  %v1275 = vadd.f32 %v70, %v1274
  %1276 = vmatmul.bf16.gmra.mxu0 %v1166
  %v1277 = vpop.f32.mrf.mxu0
  %v1278 = vadd.f32 %v70, %v1277
  %v1279 = vpop.f32.mrf.mxu0
  %v1280 = vadd.f32 %v70, %v1279
  %1281 = vmatmul.bf16.gmra.mxu0 %v1169
  %v1282 = vpop.f32.mrf.mxu0
  %v1283 = vadd.f32 %v70, %v1282
  %v1284 = vpop.f32.mrf.mxu0
  %v1285 = vadd.f32 %v70, %v1284
  %1286 = vmatmul.bf16.gmra.mxu0 %v1172
  %v1287 = vpop.f32.mrf.mxu0
  %v1288 = vadd.f32 %v70, %v1287
  %v1289 = vpop.f32.mrf.mxu0
  %v1290 = vadd.f32 %v70, %v1289
  %1291 = vmatmul.bf16.gmra.mxu0 %v1175
  %v1292 = vpop.f32.mrf.mxu0
  %v1293 = vadd.f32 %v70, %v1292
  %v1294 = vpop.f32.mrf.mxu0
  %v1295 = vadd.f32 %v70, %v1294
  %1296 = vmatmul.bf16.gmra.mxu0 %v1178
  %v1297 = vpop.f32.mrf.mxu0
  %v1298 = vadd.f32 %v70, %v1297
  %v1299 = vpop.f32.mrf.mxu0
  %v1300 = vadd.f32 %v70, %v1299
  %1301 = vmatmul.bf16.gmra.mxu0 %v1181
  %v1302 = vpop.f32.mrf.mxu0
  %v1303 = vadd.f32 %v70, %v1302
  %v1304 = vpop.f32.mrf.mxu0
  %v1305 = vadd.f32 %v70, %v1304
  %1306 = vmatmul.bf16.gmra.mxu0 %v1184
  %v1307 = vpop.f32.mrf.mxu0
  %v1308 = vadd.f32 %v70, %v1307
  %v1309 = vpop.f32.mrf.mxu0
  %v1310 = vadd.f32 %v70, %v1309
  %1311 = vmatmul.bf16.gmra.mxu0 %v1187
  %v1312 = vpop.f32.mrf.mxu0
  %v1313 = vadd.f32 %v70, %v1312
  %v1314 = vpop.f32.mrf.mxu0
  %v1315 = vadd.f32 %v70, %v1314
  %1316 = vmatmul.bf16.gmra.mxu0 %v1190
  %v1317 = vpop.f32.mrf.mxu0
  %v1318 = vadd.f32 %v70, %v1317
  %v1319 = vpop.f32.mrf.mxu0
  %v1320 = vadd.f32 %v70, %v1319
  %1321 = vmatmul.bf16.gmra.mxu0 %v1193
  %v1322 = vpop.f32.mrf.mxu0
  %v1323 = vadd.f32 %v70, %v1322
  %v1324 = vpop.f32.mrf.mxu0
  %v1325 = vadd.f32 %v70, %v1324
  %1326 = vmatmul.bf16.gmra.mxu0 %v1196
  %v1327 = vpop.f32.mrf.mxu0
  %v1328 = vadd.f32 %v70, %v1327
  %v1329 = vpop.f32.mrf.mxu0
  %1330 = vdwg.mxu0
  %v1331 = vmax.f32 %v1208, 0.0
  %v1332 = vmax.f32 %v1210, 0.0
  %v1333 = vmax.f32 %v1213, 0.0
  %v1334 = vmax.f32 %v1215, 0.0
  %v1335 = vmax.f32 %v1218, 0.0
  %v1336 = vmax.f32 %v1220, 0.0
  %v1337 = vmax.f32 %v1223, 0.0
  %v1338 = vmax.f32 %v1225, 0.0
  %v1339 = vmax.f32 %v1228, 0.0
  %v1340 = vmax.f32 %v1230, 0.0
  %v1341 = vmax.f32 %v1233, 0.0
  %v1342 = vmax.f32 %v1235, 0.0
  %v1343 = vmax.f32 %v1238, 0.0
  %v1344 = vmax.f32 %v1240, 0.0
  %v1345 = vmax.f32 %v1243, 0.0
  %v1346 = vmax.f32 %v1245, 0.0
  %v1347 = vmax.f32 %v1248, 0.0
  %v1348 = vmax.f32 %v1250, 0.0
  %v1349 = vmax.f32 %v1253, 0.0
  %v1350 = vmax.f32 %v1255, 0.0
  %v1351 = vmax.f32 %v1258, 0.0
  %v1352 = vmax.f32 %v1260, 0.0
  %v1353 = vmax.f32 %v1263, 0.0
  %v1354 = vmax.f32 %v1265, 0.0
  %v1355 = vmax.f32 %v1268, 0.0
  %v1356 = vmax.f32 %v1270, 0.0
  %v1357 = vmax.f32 %v1273, 0.0
  %v1358 = vmax.f32 %v1275, 0.0
  %v1359 = vmax.f32 %v1278, 0.0
  %v1360 = vmax.f32 %v1280, 0.0
  %v1361 = vmax.f32 %v1283, 0.0
  %v1362 = vmax.f32 %v1285, 0.0
  %v1363 = vmax.f32 %v1288, 0.0
  %v1364 = vmax.f32 %v1290, 0.0
  %v1365 = vmax.f32 %v1293, 0.0
  %v1366 = vmax.f32 %v1295, 0.0
  %v1367 = vmax.f32 %v1298, 0.0
  %v1368 = vmax.f32 %v1300, 0.0
  %v1369 = vmax.f32 %v1303, 0.0
  %v1370 = vmax.f32 %v1305, 0.0
  %v1371 = vmax.f32 %v1308, 0.0
  %v1372 = vmax.f32 %v1310, 0.0
  %v1373 = vmax.f32 %v1313, 0.0
  %v1374 = vmax.f32 %v1315, 0.0
  %v1375 = vmax.f32 %v1318, 0.0
  %v1376 = vmax.f32 %v1320, 0.0
  %v1377 = vmax.f32 %v1323, 0.0
  %v1378 = vmax.f32 %v1325, 0.0
  %v1379 = vmax.f32 %v1328, 0.0
  %v1380 = vmax.f32 %v901, %v1331
  %v1381 = vmax.f32 %v902, %v1332
  %v1382 = vmax.f32 %v903, %v1333
  %v1383 = vmax.f32 %v904, %v1334
  %v1384 = vmax.f32 %v905, %v1335
  %v1385 = vmax.f32 %v906, %v1336
  %v1386 = vmax.f32 %v907, %v1337
  %v1387 = vmax.f32 %v908, %v1338
  %v1388 = vmax.f32 %v909, %v1339
  %v1389 = vmax.f32 %v910, %v1340
  %v1390 = vmax.f32 %v911, %v1341
  %v1391 = vmax.f32 %v912, %v1342
  %v1392 = vmax.f32 %v913, %v1343
  %v1393 = vmax.f32 %v914, %v1344
  %v1394 = vmax.f32 %v915, %v1345
  %v1395 = vmax.f32 %v916, %v1346
  %v1396 = vmax.f32 %v917, %v1347
  %v1397 = vmax.f32 %v918, %v1348
  %v1398 = vmax.f32 %v919, %v1349
  %v1399 = vmax.f32 %v920, %v1350
  %v1400 = vmax.f32 %v921, %v1351
  %v1401 = vmax.f32 %v922, %v1352
  %v1402 = vmax.f32 %v923, %v1353
  %v1403 = vmax.f32 %v924, %v1354
  %v1404 = vmax.f32 %v925, %v1355
  %v1405 = vmax.f32 %v926, %v1356
  %v1406 = vmax.f32 %v927, %v1357
  %v1407 = vmax.f32 %v928, %v1358
  %v1408 = vmax.f32 %v929, %v1359
  %v1409 = vmax.f32 %v930, %v1360
  %v1410 = vmax.f32 %v931, %v1361
  %v1411 = vmax.f32 %v932, %v1362
  %v1412 = vmax.f32 %v933, %v1363
  %v1413 = vmax.f32 %v934, %v1364
  %v1414 = vmax.f32 %v935, %v1365
  %v1415 = vmax.f32 %v936, %v1366
  %v1416 = vmax.f32 %v937, %v1367
  %v1417 = vmax.f32 %v938, %v1368
  %v1418 = vmax.f32 %v939, %v1369
  %v1419 = vmax.f32 %v940, %v1370
  %v1420 = vmax.f32 %v941, %v1371
  %v1421 = vmax.f32 %v942, %v1372
  %v1422 = vmax.f32 %v943, %v1373
  %v1423 = vmax.f32 %v944, %v1374
  %v1424 = vmax.f32 %v945, %v1375
  %v1425 = vmax.f32 %v946, %v1376
  %v1426 = vmax.f32 %v947, %v1377
  %v1427 = vmax.f32 %v948, %v1378
  %v1428 = vmax.f32 %v949, %v1379
  %s1429 = scalar_lea.vmem %s0, 588
  %v1430 = vld [vmem:[%s1429] sm:$0xf]
  %v1431 = vld [vmem:[%s1429 + $0x4] sm:$0xf]
  %v1432 = vld [vmem:[%s1429 + $0x8] sm:$0xf]
  %v1433 = vld [vmem:[%s1429 + $0xc] sm:$0xf]
  %v1434 = vld [vmem:[%s1429 + $0x10] sm:$0xf]
  %v1435 = vld [vmem:[%s1429 + $0x14] sm:$0xf]
  %v1436 = vld [vmem:[%s1429 + $0x18] sm:$0xf]
  %v1437 = vld [vmem:[%s1429 + $0x1c] sm:$0xf]
  %v1438 = vld [vmem:[%s1429 + $0x20] sm:$0xf]
  %v1439 = vld [vmem:[%s1429 + $0x24] sm:$0xf]
  %v1440 = vld [vmem:[%s1429 + $0x28] sm:$0xf]
  %v1441 = vld [vmem:[%s1429 + $0x2c] sm:$0xf]
  %v1442 = vld [vmem:[%s1429 + $0x30] sm:$0xf]
  %v1443 = vld [vmem:[%s1429 + $0x34] sm:$0xf]
  %v1444 = vld [vmem:[%s1429 + $0x38] sm:$0xf]
  %v1445 = vld [vmem:[%s1429 + $0x3c] sm:$0xf]
  %v1446 = vld [vmem:[%s1429 + $0x40] sm:$0xf]
  %v1447 = vld [vmem:[%s1429 + $0x44] sm:$0xf]
  %v1448 = vld [vmem:[%s1429 + $0x48] sm:$0xf]
  %v1449 = vld [vmem:[%s1429 + $0x4c] sm:$0xf]
  %v1450 = vld [vmem:[%s1429 + $0x50] sm:$0xf]
  %v1451 = vld [vmem:[%s1429 + $0x54] sm:$0xf]
  %v1452 = vld [vmem:[%s1429 + $0x58] sm:$0xf]
  %v1453 = vld [vmem:[%s1429 + $0x5c] sm:$0xf]
  %v1454 = vld [vmem:[%s1429 + $0x60] sm:$0xf]
  %v1455 = vld [vmem:[%s1429 + $0x64] sm:$0xf]
  %v1456 = vld [vmem:[%s1429 + $0x68] sm:$0xf]
  %v1457 = vld [vmem:[%s1429 + $0x6c] sm:$0xf]
  %v1458 = vld [vmem:[%s1429 + $0x70] sm:$0xf]
  %v1459 = vld [vmem:[%s1429 + $0x74] sm:$0xf]
  %v1460 = vld [vmem:[%s1429 + $0x78] sm:$0xf]
  %v1461 = vld [vmem:[%s1429 + $0x7c] sm:$0xf]
  %v1462 = vld [vmem:[%s1429 + $0x80] sm:$0xf]
  %v1463 = vld [vmem:[%s1429 + $0x84] sm:$0xf]
  %v1464 = vld [vmem:[%s1429 + $0x88] sm:$0xf]
  %v1465 = vld [vmem:[%s1429 + $0x8c] sm:$0xf]
  %v1466 = vld [vmem:[%s1429 + $0x90] sm:$0xf]
  %v1467 = vld [vmem:[%s1429 + $0x94] sm:$0xf]
  %v1468 = vld [vmem:[%s1429 + $0x98] sm:$0xf]
  %v1469 = vld [vmem:[%s1429 + $0x9c] sm:$0xf]
  %v1470 = vld [vmem:[%s1429 + $0xa0] sm:$0xf]
  %v1471 = vld [vmem:[%s1429 + $0xa4] sm:$0xf]
  %v1472 = vld [vmem:[%s1429 + $0xa8] sm:$0xf]
  %v1473 = vld [vmem:[%s1429 + $0xac] sm:$0xf]
  %v1474 = vld [vmem:[%s1429 + $0xb0] sm:$0xf]
  %v1475 = vld [vmem:[%s1429 + $0xb4] sm:$0xf]
  %v1476 = vld [vmem:[%s1429 + $0xb8] sm:$0xf]
  %v1477 = vld [vmem:[%s1429 + $0xbc] sm:$0xf]
  %v1478 = vld [vmem:[%s1429 + $0xc0] sm:$0xf]
  %v1528 = vunpack.c.l.b16 %v1430
  %v1529 = vunpack.c.l.b16 %v1431
  %v1530 = vunpack.c.l.b16 %v1432
  %v1531 = vunpack.c.l.b16 %v1433
  %v1532 = vunpack.c.l.b16 %v1434
  %v1533 = vunpack.c.l.b16 %v1435
  %v1534 = vunpack.c.l.b16 %v1436
  %v1535 = vunpack.c.l.b16 %v1437
  %v1536 = vunpack.c.l.b16 %v1438
  %v1537 = vunpack.c.l.b16 %v1439
  %v1538 = vunpack.c.l.b16 %v1440
  %v1539 = vunpack.c.l.b16 %v1441
  %v1540 = vunpack.c.l.b16 %v1442
  %v1541 = vunpack.c.l.b16 %v1443
  %v1542 = vunpack.c.l.b16 %v1444
  %v1543 = vunpack.c.l.b16 %v1445
  %v1544 = vunpack.c.l.b16 %v1446
  %v1545 = vunpack.c.l.b16 %v1447
  %v1546 = vunpack.c.l.b16 %v1448
  %v1547 = vunpack.c.l.b16 %v1449
  %v1548 = vunpack.c.l.b16 %v1450
  %v1549 = vunpack.c.l.b16 %v1451
  %v1550 = vunpack.c.l.b16 %v1452
  %v1551 = vunpack.c.l.b16 %v1453
  %v1552 = vunpack.c.l.b16 %v1454
  %v1553 = vunpack.c.l.b16 %v1455
  %v1554 = vunpack.c.l.b16 %v1456
  %v1555 = vunpack.c.l.b16 %v1457
  %v1556 = vunpack.c.l.b16 %v1458
  %v1557 = vunpack.c.l.b16 %v1459
  %v1558 = vunpack.c.l.b16 %v1460
  %v1559 = vunpack.c.l.b16 %v1461
  %v1560 = vunpack.c.l.b16 %v1462
  %v1561 = vunpack.c.l.b16 %v1463
  %v1562 = vunpack.c.l.b16 %v1464
  %v1563 = vunpack.c.l.b16 %v1465
  %v1564 = vunpack.c.l.b16 %v1466
  %v1565 = vunpack.c.l.b16 %v1467
  %v1566 = vunpack.c.l.b16 %v1468
  %v1567 = vunpack.c.l.b16 %v1469
  %v1568 = vunpack.c.l.b16 %v1470
  %v1569 = vunpack.c.l.b16 %v1471
  %v1570 = vunpack.c.l.b16 %v1472
  %v1571 = vunpack.c.l.b16 %v1473
  %v1572 = vunpack.c.l.b16 %v1474
  %v1573 = vunpack.c.l.b16 %v1475
  %v1574 = vunpack.c.l.b16 %v1476
  %v1575 = vunpack.c.l.b16 %v1477
  %v1576 = vunpack.c.l.b16 %v1478
  %v1577 = vpack.c.b16 %v1529, %v1528
  %v1578 = vpack.c.b16 %v1531, %v1530
  %v1579 = vpack.c.b16 %v1533, %v1532
  %v1580 = vpack.c.b16 %v1535, %v1534
  %v1581 = vpack.c.b16 %v1537, %v1536
  %v1582 = vpack.c.b16 %v1539, %v1538
  %v1583 = vpack.c.b16 %v1541, %v1540
  %v1584 = vpack.c.b16 %v1543, %v1542
  %v1585 = vpack.c.b16 %v1545, %v1544
  %v1586 = vpack.c.b16 %v1547, %v1546
  %v1587 = vpack.c.b16 %v1549, %v1548
  %v1588 = vpack.c.b16 %v1551, %v1550
  %v1589 = vpack.c.b16 %v1553, %v1552
  %v1590 = vpack.c.b16 %v1555, %v1554
  %v1591 = vpack.c.b16 %v1557, %v1556
  %v1592 = vpack.c.b16 %v1559, %v1558
  %v1593 = vpack.c.b16 %v1561, %v1560
  %v1594 = vpack.c.b16 %v1563, %v1562
  %v1595 = vpack.c.b16 %v1565, %v1564
  %v1596 = vpack.c.b16 %v1567, %v1566
  %v1597 = vpack.c.b16 %v1569, %v1568
  %v1598 = vpack.c.b16 %v1571, %v1570
  %v1599 = vpack.c.b16 %v1573, %v1572
  %v1600 = vpack.c.b16 %v1575, %v1574
  %v1601 = vpack.c.b16 %v1576, %v1576
  %v1603 = vsel %vm206, %v1577, 0
  %v1606 = vsel %vm206, %v1578, 0
  %v1609 = vsel %vm206, %v1579, 0
  %v1612 = vsel %vm206, %v1580, 0
  %v1615 = vsel %vm206, %v1581, 0
  %v1618 = vsel %vm206, %v1582, 0
  %v1621 = vsel %vm206, %v1583, 0
  %v1624 = vsel %vm206, %v1584, 0
  %v1627 = vsel %vm206, %v1585, 0
  %v1630 = vsel %vm206, %v1586, 0
  %v1633 = vsel %vm206, %v1587, 0
  %v1636 = vsel %vm206, %v1588, 0
  %v1639 = vsel %vm206, %v1589, 0
  %v1642 = vsel %vm206, %v1590, 0
  %v1645 = vsel %vm206, %v1591, 0
  %v1648 = vsel %vm206, %v1592, 0
  %v1651 = vsel %vm206, %v1593, 0
  %v1654 = vsel %vm206, %v1594, 0
  %v1657 = vsel %vm206, %v1595, 0
  %v1660 = vsel %vm206, %v1596, 0
  %v1663 = vsel %vm206, %v1597, 0
  %v1666 = vsel %vm206, %v1598, 0
  %v1669 = vsel %vm206, %v1599, 0
  %v1672 = vsel %vm206, %v1600, 0
  %v1675 = vsel %vm206, %v1601, 0
  %1677 = vmatpush.bf16.msra.mxu0 0
  %1678 = vmatpush.bf16.msra.mxu0 0
  %1679 = vmatpush.bf16.msra.mxu0 0
  %1680 = vmatpush.bf16.msra.mxu0 0
  %1681 = vmatpush.bf16.msra.mxu0 0
  %1682 = vmatpush.bf16.msra.mxu0 0
  %1683 = vmatpush.bf16.msra.mxu0 %v287
  %1684 = vmatpush.bf16.msra.mxu0 %v203
  %1685 = vmatmul.bf16.gmra.mxu0 %v1603
  %v1686 = vpop.f32.mrf.mxu0
  %v1687 = vadd.f32 %v70, %v1686
  %v1688 = vpop.f32.mrf.mxu0
  %v1689 = vadd.f32 %v70, %v1688
  %1690 = vmatmul.bf16.gmra.mxu0 %v1606
  %v1691 = vpop.f32.mrf.mxu0
  %v1692 = vadd.f32 %v70, %v1691
  %v1693 = vpop.f32.mrf.mxu0
  %v1694 = vadd.f32 %v70, %v1693
  %1695 = vmatmul.bf16.gmra.mxu0 %v1609
  %v1696 = vpop.f32.mrf.mxu0
  %v1697 = vadd.f32 %v70, %v1696
  %v1698 = vpop.f32.mrf.mxu0
  %v1699 = vadd.f32 %v70, %v1698
  %1700 = vmatmul.bf16.gmra.mxu0 %v1612
  %v1701 = vpop.f32.mrf.mxu0
  %v1702 = vadd.f32 %v70, %v1701
  %v1703 = vpop.f32.mrf.mxu0
  %v1704 = vadd.f32 %v70, %v1703
  %1705 = vmatmul.bf16.gmra.mxu0 %v1615
  %v1706 = vpop.f32.mrf.mxu0
  %v1707 = vadd.f32 %v70, %v1706
  %v1708 = vpop.f32.mrf.mxu0
  %v1709 = vadd.f32 %v70, %v1708
  %1710 = vmatmul.bf16.gmra.mxu0 %v1618
  %v1711 = vpop.f32.mrf.mxu0
  %v1712 = vadd.f32 %v70, %v1711
  %v1713 = vpop.f32.mrf.mxu0
  %v1714 = vadd.f32 %v70, %v1713
  %1715 = vmatmul.bf16.gmra.mxu0 %v1621
  %v1716 = vpop.f32.mrf.mxu0
  %v1717 = vadd.f32 %v70, %v1716
  %v1718 = vpop.f32.mrf.mxu0
  %v1719 = vadd.f32 %v70, %v1718
  %1720 = vmatmul.bf16.gmra.mxu0 %v1624
  %v1721 = vpop.f32.mrf.mxu0
  %v1722 = vadd.f32 %v70, %v1721
  %v1723 = vpop.f32.mrf.mxu0
  %v1724 = vadd.f32 %v70, %v1723
  %1725 = vmatmul.bf16.gmra.mxu0 %v1627
  %v1726 = vpop.f32.mrf.mxu0
  %v1727 = vadd.f32 %v70, %v1726
  %v1728 = vpop.f32.mrf.mxu0
  %v1729 = vadd.f32 %v70, %v1728
  %1730 = vmatmul.bf16.gmra.mxu0 %v1630
  %v1731 = vpop.f32.mrf.mxu0
  %v1732 = vadd.f32 %v70, %v1731
  %v1733 = vpop.f32.mrf.mxu0
  %v1734 = vadd.f32 %v70, %v1733
  %1735 = vmatmul.bf16.gmra.mxu0 %v1633
  %v1736 = vpop.f32.mrf.mxu0
  %v1737 = vadd.f32 %v70, %v1736
  %v1738 = vpop.f32.mrf.mxu0
  %v1739 = vadd.f32 %v70, %v1738
  %1740 = vmatmul.bf16.gmra.mxu0 %v1636
  %v1741 = vpop.f32.mrf.mxu0
  %v1742 = vadd.f32 %v70, %v1741
  %v1743 = vpop.f32.mrf.mxu0
  %v1744 = vadd.f32 %v70, %v1743
  %1745 = vmatmul.bf16.gmra.mxu0 %v1639
  %v1746 = vpop.f32.mrf.mxu0
  %v1747 = vadd.f32 %v70, %v1746
  %v1748 = vpop.f32.mrf.mxu0
  %v1749 = vadd.f32 %v70, %v1748
  %1750 = vmatmul.bf16.gmra.mxu0 %v1642
  %v1751 = vpop.f32.mrf.mxu0
  %v1752 = vadd.f32 %v70, %v1751
  %v1753 = vpop.f32.mrf.mxu0
  %v1754 = vadd.f32 %v70, %v1753
  %1755 = vmatmul.bf16.gmra.mxu0 %v1645
  %v1756 = vpop.f32.mrf.mxu0
  %v1757 = vadd.f32 %v70, %v1756
  %v1758 = vpop.f32.mrf.mxu0
  %v1759 = vadd.f32 %v70, %v1758
  %1760 = vmatmul.bf16.gmra.mxu0 %v1648
  %v1761 = vpop.f32.mrf.mxu0
  %v1762 = vadd.f32 %v70, %v1761
  %v1763 = vpop.f32.mrf.mxu0
  %v1764 = vadd.f32 %v70, %v1763
  %1765 = vmatmul.bf16.gmra.mxu0 %v1651
  %v1766 = vpop.f32.mrf.mxu0
  %v1767 = vadd.f32 %v70, %v1766
  %v1768 = vpop.f32.mrf.mxu0
  %v1769 = vadd.f32 %v70, %v1768
  %1770 = vmatmul.bf16.gmra.mxu0 %v1654
  %v1771 = vpop.f32.mrf.mxu0
  %v1772 = vadd.f32 %v70, %v1771
  %v1773 = vpop.f32.mrf.mxu0
  %v1774 = vadd.f32 %v70, %v1773
  %1775 = vmatmul.bf16.gmra.mxu0 %v1657
  %v1776 = vpop.f32.mrf.mxu0
  %v1777 = vadd.f32 %v70, %v1776
  %v1778 = vpop.f32.mrf.mxu0
  %v1779 = vadd.f32 %v70, %v1778
  %1780 = vmatmul.bf16.gmra.mxu0 %v1660
  %v1781 = vpop.f32.mrf.mxu0
  %v1782 = vadd.f32 %v70, %v1781
  %v1783 = vpop.f32.mrf.mxu0
  %v1784 = vadd.f32 %v70, %v1783
  %1785 = vmatmul.bf16.gmra.mxu0 %v1663
  %v1786 = vpop.f32.mrf.mxu0
  %v1787 = vadd.f32 %v70, %v1786
  %v1788 = vpop.f32.mrf.mxu0
  %v1789 = vadd.f32 %v70, %v1788
  %1790 = vmatmul.bf16.gmra.mxu0 %v1666
  %v1791 = vpop.f32.mrf.mxu0
  %v1792 = vadd.f32 %v70, %v1791
  %v1793 = vpop.f32.mrf.mxu0
  %v1794 = vadd.f32 %v70, %v1793
  %1795 = vmatmul.bf16.gmra.mxu0 %v1669
  %v1796 = vpop.f32.mrf.mxu0
  %v1797 = vadd.f32 %v70, %v1796
  %v1798 = vpop.f32.mrf.mxu0
  %v1799 = vadd.f32 %v70, %v1798
  %1800 = vmatmul.bf16.gmra.mxu0 %v1672
  %v1801 = vpop.f32.mrf.mxu0
  %v1802 = vadd.f32 %v70, %v1801
  %v1803 = vpop.f32.mrf.mxu0
  %v1804 = vadd.f32 %v70, %v1803
  %1805 = vmatmul.bf16.gmra.mxu0 %v1675
  %v1806 = vpop.f32.mrf.mxu0
  %v1807 = vadd.f32 %v70, %v1806
  %v1808 = vpop.f32.mrf.mxu0
  %1809 = vdwg.mxu0
  %v1810 = vmax.f32 %v1687, 0.0
  %v1811 = vmax.f32 %v1689, 0.0
  %v1812 = vmax.f32 %v1692, 0.0
  %v1813 = vmax.f32 %v1694, 0.0
  %v1814 = vmax.f32 %v1697, 0.0
  %v1815 = vmax.f32 %v1699, 0.0
  %v1816 = vmax.f32 %v1702, 0.0
  %v1817 = vmax.f32 %v1704, 0.0
  %v1818 = vmax.f32 %v1707, 0.0
  %v1819 = vmax.f32 %v1709, 0.0
  %v1820 = vmax.f32 %v1712, 0.0
  %v1821 = vmax.f32 %v1714, 0.0
  %v1822 = vmax.f32 %v1717, 0.0
  %v1823 = vmax.f32 %v1719, 0.0
  %v1824 = vmax.f32 %v1722, 0.0
  %v1825 = vmax.f32 %v1724, 0.0
  %v1826 = vmax.f32 %v1727, 0.0
  %v1827 = vmax.f32 %v1729, 0.0
  %v1828 = vmax.f32 %v1732, 0.0
  %v1829 = vmax.f32 %v1734, 0.0
  %v1830 = vmax.f32 %v1737, 0.0
  %v1831 = vmax.f32 %v1739, 0.0
  %v1832 = vmax.f32 %v1742, 0.0
  %v1833 = vmax.f32 %v1744, 0.0
  %v1834 = vmax.f32 %v1747, 0.0
  %v1835 = vmax.f32 %v1749, 0.0
  %v1836 = vmax.f32 %v1752, 0.0
  %v1837 = vmax.f32 %v1754, 0.0
  %v1838 = vmax.f32 %v1757, 0.0
  %v1839 = vmax.f32 %v1759, 0.0
  %v1840 = vmax.f32 %v1762, 0.0
  %v1841 = vmax.f32 %v1764, 0.0
  %v1842 = vmax.f32 %v1767, 0.0
  %v1843 = vmax.f32 %v1769, 0.0
  %v1844 = vmax.f32 %v1772, 0.0
  %v1845 = vmax.f32 %v1774, 0.0
  %v1846 = vmax.f32 %v1777, 0.0
  %v1847 = vmax.f32 %v1779, 0.0
  %v1848 = vmax.f32 %v1782, 0.0
  %v1849 = vmax.f32 %v1784, 0.0
  %v1850 = vmax.f32 %v1787, 0.0
  %v1851 = vmax.f32 %v1789, 0.0
  %v1852 = vmax.f32 %v1792, 0.0
  %v1853 = vmax.f32 %v1794, 0.0
  %v1854 = vmax.f32 %v1797, 0.0
  %v1855 = vmax.f32 %v1799, 0.0
  %v1856 = vmax.f32 %v1802, 0.0
  %v1857 = vmax.f32 %v1804, 0.0
  %v1858 = vmax.f32 %v1807, 0.0
  %v1859 = vmax.f32 %v1380, %v1810
  %v1860 = vmax.f32 %v1381, %v1811
  %v1861 = vmax.f32 %v1382, %v1812
  %v1862 = vmax.f32 %v1383, %v1813
  %v1863 = vmax.f32 %v1384, %v1814
  %v1864 = vmax.f32 %v1385, %v1815
  %v1865 = vmax.f32 %v1386, %v1816
  %v1866 = vmax.f32 %v1387, %v1817
  %v1867 = vmax.f32 %v1388, %v1818
  %v1868 = vmax.f32 %v1389, %v1819
  %v1869 = vmax.f32 %v1390, %v1820
  %v1870 = vmax.f32 %v1391, %v1821
  %v1871 = vmax.f32 %v1392, %v1822
  %v1872 = vmax.f32 %v1393, %v1823
  %v1873 = vmax.f32 %v1394, %v1824
  %v1874 = vmax.f32 %v1395, %v1825
  %v1875 = vmax.f32 %v1396, %v1826
  %v1876 = vmax.f32 %v1397, %v1827
  %v1877 = vmax.f32 %v1398, %v1828
  %v1878 = vmax.f32 %v1399, %v1829
  %v1879 = vmax.f32 %v1400, %v1830
  %v1880 = vmax.f32 %v1401, %v1831
  %v1881 = vmax.f32 %v1402, %v1832
  %v1882 = vmax.f32 %v1403, %v1833
  %v1883 = vmax.f32 %v1404, %v1834
  %v1884 = vmax.f32 %v1405, %v1835
  %v1885 = vmax.f32 %v1406, %v1836
  %v1886 = vmax.f32 %v1407, %v1837
  %v1887 = vmax.f32 %v1408, %v1838
  %v1888 = vmax.f32 %v1409, %v1839
  %v1889 = vmax.f32 %v1410, %v1840
  %v1890 = vmax.f32 %v1411, %v1841
  %v1891 = vmax.f32 %v1412, %v1842
  %v1892 = vmax.f32 %v1413, %v1843
  %v1893 = vmax.f32 %v1414, %v1844
  %v1894 = vmax.f32 %v1415, %v1845
  %v1895 = vmax.f32 %v1416, %v1846
  %v1896 = vmax.f32 %v1417, %v1847
  %v1897 = vmax.f32 %v1418, %v1848
  %v1898 = vmax.f32 %v1419, %v1849
  %v1899 = vmax.f32 %v1420, %v1850
  %v1900 = vmax.f32 %v1421, %v1851
  %v1901 = vmax.f32 %v1422, %v1852
  %v1902 = vmax.f32 %v1423, %v1853
  %v1903 = vmax.f32 %v1424, %v1854
  %v1904 = vmax.f32 %v1425, %v1855
  %v1905 = vmax.f32 %v1426, %v1856
  %v1906 = vmax.f32 %v1427, %v1857
  %v1907 = vmax.f32 %v1428, %v1858
  %v1908 = vpack.c.bf16 %v1859, %v1859
  %v1909 = vpack.c.bf16 %v1860, %v1860
  %v1910 = vpack.c.bf16 %v1861, %v1861
  %v1911 = vpack.c.bf16 %v1862, %v1862
  %v1912 = vpack.c.bf16 %v1863, %v1863
  %v1913 = vpack.c.bf16 %v1864, %v1864
  %v1914 = vpack.c.bf16 %v1865, %v1865
  %v1915 = vpack.c.bf16 %v1866, %v1866
  %v1916 = vpack.c.bf16 %v1867, %v1867
  %v1917 = vpack.c.bf16 %v1868, %v1868
  %v1918 = vpack.c.bf16 %v1869, %v1869
  %v1919 = vpack.c.bf16 %v1870, %v1870
  %v1920 = vpack.c.bf16 %v1871, %v1871
  %v1921 = vpack.c.bf16 %v1872, %v1872
  %v1922 = vpack.c.bf16 %v1873, %v1873
  %v1923 = vpack.c.bf16 %v1874, %v1874
  %v1924 = vpack.c.bf16 %v1875, %v1875
  %v1925 = vpack.c.bf16 %v1876, %v1876
  %v1926 = vpack.c.bf16 %v1877, %v1877
  %v1927 = vpack.c.bf16 %v1878, %v1878
  %v1928 = vpack.c.bf16 %v1879, %v1879
  %v1929 = vpack.c.bf16 %v1880, %v1880
  %v1930 = vpack.c.bf16 %v1881, %v1881
  %v1931 = vpack.c.bf16 %v1882, %v1882
  %v1932 = vpack.c.bf16 %v1883, %v1883
  %v1933 = vpack.c.bf16 %v1884, %v1884
  %v1934 = vpack.c.bf16 %v1885, %v1885
  %v1935 = vpack.c.bf16 %v1886, %v1886
  %v1936 = vpack.c.bf16 %v1887, %v1887
  %v1937 = vpack.c.bf16 %v1888, %v1888
  %v1938 = vpack.c.bf16 %v1889, %v1889
  %v1939 = vpack.c.bf16 %v1890, %v1890
  %v1940 = vpack.c.bf16 %v1891, %v1891
  %v1941 = vpack.c.bf16 %v1892, %v1892
  %v1942 = vpack.c.bf16 %v1893, %v1893
  %v1943 = vpack.c.bf16 %v1894, %v1894
  %v1944 = vpack.c.bf16 %v1895, %v1895
  %v1945 = vpack.c.bf16 %v1896, %v1896
  %v1946 = vpack.c.bf16 %v1897, %v1897
  %v1947 = vpack.c.bf16 %v1898, %v1898
  %v1948 = vpack.c.bf16 %v1899, %v1899
  %v1949 = vpack.c.bf16 %v1900, %v1900
  %v1950 = vpack.c.bf16 %v1901, %v1901
  %v1951 = vpack.c.bf16 %v1902, %v1902
  %v1952 = vpack.c.bf16 %v1903, %v1903
  %v1953 = vpack.c.bf16 %v1904, %v1904
  %v1954 = vpack.c.bf16 %v1905, %v1905
  %v1955 = vpack.c.bf16 %v1906, %v1906
  %v1956 = vpack.c.bf16 %v1907, %v1907
  %vm1957 = vcmask 44032
  %1958 = vst.msk [vmem:[%s3] sm:$0xf] %vm1957, %v1908
  %1959 = vst.msk [vmem:[%s3 + $0x4] sm:$0xf] %vm1957, %v1909
  %1960 = vst.msk [vmem:[%s3 + $0x8] sm:$0xf] %vm1957, %v1910
  %1961 = vst.msk [vmem:[%s3 + $0xc] sm:$0xf] %vm1957, %v1911
  %1962 = vst.msk [vmem:[%s3 + $0x10] sm:$0xf] %vm1957, %v1912
  %1963 = vst.msk [vmem:[%s3 + $0x14] sm:$0xf] %vm1957, %v1913
  %1964 = vst.msk [vmem:[%s3 + $0x18] sm:$0xf] %vm1957, %v1914
  %1965 = vst.msk [vmem:[%s3 + $0x1c] sm:$0xf] %vm1957, %v1915
  %1966 = vst.msk [vmem:[%s3 + $0x20] sm:$0xf] %vm1957, %v1916
  %1967 = vst.msk [vmem:[%s3 + $0x24] sm:$0xf] %vm1957, %v1917
  %1968 = vst.msk [vmem:[%s3 + $0x28] sm:$0xf] %vm1957, %v1918
  %1969 = vst.msk [vmem:[%s3 + $0x2c] sm:$0xf] %vm1957, %v1919
  %1970 = vst.msk [vmem:[%s3 + $0x30] sm:$0xf] %vm1957, %v1920
  %1971 = vst.msk [vmem:[%s3 + $0x34] sm:$0xf] %vm1957, %v1921
  %1972 = vst.msk [vmem:[%s3 + $0x38] sm:$0xf] %vm1957, %v1922
  %1973 = vst.msk [vmem:[%s3 + $0x3c] sm:$0xf] %vm1957, %v1923
  %1974 = vst.msk [vmem:[%s3 + $0x40] sm:$0xf] %vm1957, %v1924
  %1975 = vst.msk [vmem:[%s3 + $0x44] sm:$0xf] %vm1957, %v1925
  %1976 = vst.msk [vmem:[%s3 + $0x48] sm:$0xf] %vm1957, %v1926
  %1977 = vst.msk [vmem:[%s3 + $0x4c] sm:$0xf] %vm1957, %v1927
  %1978 = vst.msk [vmem:[%s3 + $0x50] sm:$0xf] %vm1957, %v1928
  %1979 = vst.msk [vmem:[%s3 + $0x54] sm:$0xf] %vm1957, %v1929
  %1980 = vst.msk [vmem:[%s3 + $0x58] sm:$0xf] %vm1957, %v1930
  %1981 = vst.msk [vmem:[%s3 + $0x5c] sm:$0xf] %vm1957, %v1931
  %1982 = vst.msk [vmem:[%s3 + $0x60] sm:$0xf] %vm1957, %v1932
  %1983 = vst.msk [vmem:[%s3 + $0x64] sm:$0xf] %vm1957, %v1933
  %1984 = vst.msk [vmem:[%s3 + $0x68] sm:$0xf] %vm1957, %v1934
  %1985 = vst.msk [vmem:[%s3 + $0x6c] sm:$0xf] %vm1957, %v1935
  %1986 = vst.msk [vmem:[%s3 + $0x70] sm:$0xf] %vm1957, %v1936
  %1987 = vst.msk [vmem:[%s3 + $0x74] sm:$0xf] %vm1957, %v1937
  %1988 = vst.msk [vmem:[%s3 + $0x78] sm:$0xf] %vm1957, %v1938
  %1989 = vst.msk [vmem:[%s3 + $0x7c] sm:$0xf] %vm1957, %v1939
  %1990 = vst.msk [vmem:[%s3 + $0x80] sm:$0xf] %vm1957, %v1940
  %1991 = vst.msk [vmem:[%s3 + $0x84] sm:$0xf] %vm1957, %v1941
  %1992 = vst.msk [vmem:[%s3 + $0x88] sm:$0xf] %vm1957, %v1942
  %1993 = vst.msk [vmem:[%s3 + $0x8c] sm:$0xf] %vm1957, %v1943
  %1994 = vst.msk [vmem:[%s3 + $0x90] sm:$0xf] %vm1957, %v1944
  %1995 = vst.msk [vmem:[%s3 + $0x94] sm:$0xf] %vm1957, %v1945
  %1996 = vst.msk [vmem:[%s3 + $0x98] sm:$0xf] %vm1957, %v1946
  %1997 = vst.msk [vmem:[%s3 + $0x9c] sm:$0xf] %vm1957, %v1947
  %1998 = vst.msk [vmem:[%s3 + $0xa0] sm:$0xf] %vm1957, %v1948
  %1999 = vst.msk [vmem:[%s3 + $0xa4] sm:$0xf] %vm1957, %v1949
  %2000 = vst.msk [vmem:[%s3 + $0xa8] sm:$0xf] %vm1957, %v1950
  %2001 = vst.msk [vmem:[%s3 + $0xac] sm:$0xf] %vm1957, %v1951
  %2002 = vst.msk [vmem:[%s3 + $0xb0] sm:$0xf] %vm1957, %v1952
  %2003 = vst.msk [vmem:[%s3 + $0xb4] sm:$0xf] %vm1957, %v1953
  %2004 = vst.msk [vmem:[%s3 + $0xb8] sm:$0xf] %vm1957, %v1954
  %2005 = vst.msk [vmem:[%s3 + $0xbc] sm:$0xf] %vm1957, %v1955
  %2006 = vst.msk [vmem:[%s3 + $0xc0] sm:$0xf] %vm1957, %v1956
  // Predicated region
  $region14: #{lenet5_forward.3} parent=0 // pred_check
    _
  $region15: #{lenet5_forward.3} parent=0 // pred_check_branch
    %2008 = sbr.rel (0) target = $region17
  $region16: #{lenet5_forward.3} parent=0 // pred_region
    _
  $region17: #{lenet5_forward.3} parent=0 // pred_fallthru
    _
  // Predicated region
  $region18: #{lenet5_forward.3} parent=0 // pred_check
    _
  $region19: #{lenet5_forward.3} parent=0 // pred_check_branch
    %2010 = sbr.rel (0) target = $region21
  $region20: #{lenet5_forward.3} parent=0 // pred_region
    _
  $region21: #{lenet5_forward.3} parent=0 // pred_fallthru
    _

// kernel: lenet5_forward.4
$region0: #{lenet5_forward.4}
  #allocation0 [shape = 'u32[]', space=smem, size = 0x4, offset = 0x4, fixed_abs, tag = 'smem constant byte address 0x4 - core index']
  #allocation1 [shape = 'u32[72,128]{1,0:T(1,128)}', space=vmem, size = 0x9000, scoped, tag = 'internal scratch']
  %s0 = inlined_call_operand.vmem [shape: bf16[4,56,150], index: 0, kind: input, shape index: {}]
  %s1 = inlined_call_operand.vmem [shape: bf16[150,16], index: 1, kind: input, shape index: {}]
  %s2 = inlined_call_operand.vmem [shape: f32[1,16], index: 2, kind: input, shape index: {}]
  %s3 = inlined_call_operand.vmem [shape: bf16[56,16], index: 3, kind: output, shape index: {}]
  %s4 = sld [smem:[#allocation0]]
  $region22: #{lenet5_forward.4} parent=0
    _
  %s6 = ssub.s32 1, %s4
  %s7 = scalar_select 0, %s6, %s4
  // Predicated region
  $region2: #{lenet5_forward.4} parent=0 // pred_check
    _
  $region3: #{lenet5_forward.4} parent=0 // pred_check_branch
    %9 = sbr.rel (0) target = $region5
  $region4: #{lenet5_forward.4} parent=0 // pred_region
    _
  $region5: #{lenet5_forward.4} parent=0 // pred_fallthru
    _
  // Predicated region
  $region6: #{lenet5_forward.4} parent=0 // pred_check
    _
  $region7: #{lenet5_forward.4} parent=0 // pred_check_branch
    %11 = sbr.rel (0) target = $region9
  $region8: #{lenet5_forward.4} parent=0 // pred_region
    _
  $region9: #{lenet5_forward.4} parent=0 // pred_fallthru
    _
  // Predicated region
  $region10: #{lenet5_forward.4} parent=0 // pred_check
    _
  $region11: #{lenet5_forward.4} parent=0 // pred_check_branch
    %13 = sbr.rel (0) target = $region13
  $region12: #{lenet5_forward.4} parent=0 // pred_region
    _
  $region13: #{lenet5_forward.4} parent=0 // pred_fallthru
    _
  %v15 = vld [vmem:[%s2] sm:$0x1]
  %v16 = vld [vmem:[%s0] sm:$0xff]
  %v17 = vld [vmem:[%s0 + $0x8] sm:$0xff]
  %v18 = vld [vmem:[%s0 + $0x10] sm:$0xff]
  %v19 = vld [vmem:[%s0 + $0x18] sm:$0xff]
  %v20 = vld [vmem:[%s0 + $0x20] sm:$0xff]
  %v21 = vld [vmem:[%s0 + $0x28] sm:$0xff]
  %v22 = vld [vmem:[%s0 + $0x30] sm:$0xff]
  %v23 = vld [vmem:[%s1] sm:$0xf]
  %v24 = vld [vmem:[%s1 + $0x4] sm:$0xf]
  %v25 = vld [vmem:[%s1 + $0x8] sm:$0xf]
  %v26 = vld [vmem:[%s1 + $0xc] sm:$0xf]
  %v27 = vld [vmem:[%s1 + $0x10] sm:$0xf]
  %v28 = vld [vmem:[%s1 + $0x14] sm:$0xf]
  %v29 = vld [vmem:[%s1 + $0x18] sm:$0xf]
  %v30 = vld [vmem:[%s1 + $0x1c] sm:$0xf]
  %v31 = vld [vmem:[%s1 + $0x20] sm:$0xf]
  %v32 = vld [vmem:[%s1 + $0x24] sm:$0xf]
  %v33 = vld [vmem:[%s1 + $0x28] sm:$0xf]
  %v34 = vld [vmem:[%s1 + $0x2c] sm:$0xf]
  %v35 = vld [vmem:[%s1 + $0x30] sm:$0xf]
  %v36 = vld [vmem:[%s1 + $0x34] sm:$0xf]
  %v37 = vld [vmem:[%s1 + $0x38] sm:$0xf]
  %v38 = vld [vmem:[%s1 + $0x3c] sm:$0xf]
  %v39 = vld [vmem:[%s1 + $0x40] sm:$0xf]
  %v40 = vld [vmem:[%s1 + $0x44] sm:$0xf]
  %v41 = vld [vmem:[%s1 + $0x48] sm:$0x7]
  %v43 = vperm.slane %v15, 0
  %v52 = vunpack.c.l.b16 %v16
  %v53 = vunpack.c.h.b16 %v16
  %v54 = vunpack.c.l.b16 %v17
  %v55 = vunpack.c.h.b16 %v17
  %v56 = vunpack.c.l.b16 %v18
  %v57 = vunpack.c.h.b16 %v18
  %v58 = vunpack.c.l.b16 %v19
  %v59 = vunpack.c.h.b16 %v19
  %v60 = vunpack.c.l.b16 %v20
  %v61 = vunpack.c.h.b16 %v20
  %v62 = vunpack.c.l.b16 %v21
  %v63 = vunpack.c.h.b16 %v21
  %v64 = vunpack.c.l.b16 %v22
  %v65 = vunpack.c.h.b16 %v22
  %v66 = vpack.c.b16 %v54, %v52
  %v67 = vpack.c.b16 %v55, %v53
  %v68 = vpack.c.b16 %v58, %v56
  %v69 = vpack.c.b16 %v59, %v57
  %v70 = vpack.c.b16 %v62, %v60
  %v71 = vpack.c.b16 %v63, %v61
  %v72 = vpack.c.b16 %v64, %v64
  %v73 = vpack.c.b16 %v65, %v65
  %v97 = vunpack.c.l.b16 %v23
  %v98 = vunpack.c.l.b16 %v24
  %v99 = vunpack.c.l.b16 %v25
  %v100 = vunpack.c.l.b16 %v26
  %v101 = vunpack.c.l.b16 %v27
  %v102 = vunpack.c.l.b16 %v28
  %v103 = vunpack.c.l.b16 %v29
  %v104 = vunpack.c.l.b16 %v30
  %v105 = vunpack.c.l.b16 %v31
  %v106 = vunpack.c.l.b16 %v32
  %v107 = vunpack.c.l.b16 %v33
  %v108 = vunpack.c.l.b16 %v34
  %v109 = vunpack.c.l.b16 %v35
  %v110 = vunpack.c.l.b16 %v36
  %v111 = vunpack.c.l.b16 %v37
  %v112 = vunpack.c.l.b16 %v38
  %v113 = vunpack.c.l.b16 %v39
  %v114 = vunpack.c.l.b16 %v40
  %v115 = vunpack.c.l.b16 %v41
  %v116 = vpack.c.b16 %v98, %v97
  %v117 = vpack.c.b16 %v100, %v99
  %v118 = vpack.c.b16 %v102, %v101
  %v119 = vpack.c.b16 %v104, %v103
  %v120 = vpack.c.b16 %v106, %v105
  %v121 = vpack.c.b16 %v108, %v107
  %v122 = vpack.c.b16 %v110, %v109
  %v123 = vpack.c.b16 %v112, %v111
  %v124 = vpack.c.b16 %v114, %v113
  %v125 = vpack.c.b16 %v115, %v115
  %vm135 = vcmask 179200
  %v137 = vsel %vm135, %v67, 0
  %v140 = vsel %vm135, %v69, 0
  %v143 = vsel %vm135, %v71, 0
  %v146 = vsel %vm135, %v73, 0
  %vm148 = vcmask 1042432
  %v150 = vsel %vm148, %v125, 0
  %152 = vmatpush.bf16.msra.mxu0 %v123
  %153 = vmatpush.bf16.msra.mxu0 %v122
  %154 = vmatpush.bf16.msra.mxu0 %v121
  %155 = vmatpush.bf16.msra.mxu0 %v120
  %156 = vmatpush.bf16.msra.mxu0 %v119
  %157 = vmatpush.bf16.msra.mxu0 %v118
  %158 = vmatpush.bf16.msra.mxu0 %v117
  %159 = vmatpush.bf16.msra.mxu0 %v116
  %160 = vmatmul.bf16.gmra.mxu0 %v66
  %v161 = vpop.f32.mrf.mxu0
  %v162 = vadd.f32 %v43, %v161
  %v163 = vpop.f32.mrf.mxu0
  %v164 = vadd.f32 %v43, %v163
  %165 = vmatmul.bf16.gmra.mxu0 %v68
  %v166 = vpop.f32.mrf.mxu0
  %v167 = vadd.f32 %v43, %v166
  %v168 = vpop.f32.mrf.mxu0
  %v169 = vadd.f32 %v43, %v168
  %170 = vmatmul.bf16.gmra.mxu0 %v70
  %v171 = vpop.f32.mrf.mxu0
  %v172 = vadd.f32 %v43, %v171
  %v173 = vpop.f32.mrf.mxu0
  %v174 = vadd.f32 %v43, %v173
  %175 = vmatmul.bf16.gmra.mxu0 %v72
  %v176 = vpop.f32.mrf.mxu0
  %v177 = vadd.f32 %v43, %v176
  %v178 = vpop.f32.mrf.mxu0
  %179 = vdwg.mxu0
  %180 = vmatpush.bf16.msra.mxu0 0
  %181 = vmatpush.bf16.msra.mxu0 0
  %182 = vmatpush.bf16.msra.mxu0 0
  %183 = vmatpush.bf16.msra.mxu0 0
  %184 = vmatpush.bf16.msra.mxu0 0
  %185 = vmatpush.bf16.msra.mxu0 0
  %186 = vmatpush.bf16.msra.mxu0 %v150
  %187 = vmatpush.bf16.msra.mxu0 %v124
  %188 = vmatmul.bf16.gmra.mxu0 %v137
  %v189 = vpop.f32.mrf.mxu0
  %v190 = vadd.f32 %v162, %v189
  %v191 = vpop.f32.mrf.mxu0
  %v192 = vadd.f32 %v164, %v191
  %193 = vmatmul.bf16.gmra.mxu0 %v140
  %v194 = vpop.f32.mrf.mxu0
  %v195 = vadd.f32 %v167, %v194
  %v196 = vpop.f32.mrf.mxu0
  %v197 = vadd.f32 %v169, %v196
  %198 = vmatmul.bf16.gmra.mxu0 %v143
  %v199 = vpop.f32.mrf.mxu0
  %v200 = vadd.f32 %v172, %v199
  %v201 = vpop.f32.mrf.mxu0
  %v202 = vadd.f32 %v174, %v201
  %203 = vmatmul.bf16.gmra.mxu0 %v146
  %v204 = vpop.f32.mrf.mxu0
  %v205 = vadd.f32 %v177, %v204
  %v206 = vpop.f32.mrf.mxu0
  %207 = vdwg.mxu0
  %v208 = vmax.f32 %v190, 0.0
  %v209 = vmax.f32 %v192, 0.0
  %v210 = vmax.f32 %v195, 0.0
  %v211 = vmax.f32 %v197, 0.0
  %v212 = vmax.f32 %v200, 0.0
  %v213 = vmax.f32 %v202, 0.0
  %v214 = vmax.f32 %v205, 0.0
  %s215 = scalar_lea.vmem %s0, 56
  %v216 = vld [vmem:[%s215] sm:$0xff]
  %v217 = vld [vmem:[%s215 + $0x8] sm:$0xff]
  %v218 = vld [vmem:[%s215 + $0x10] sm:$0xff]
  %v219 = vld [vmem:[%s215 + $0x18] sm:$0xff]
  %v220 = vld [vmem:[%s215 + $0x20] sm:$0xff]
  %v221 = vld [vmem:[%s215 + $0x28] sm:$0xff]
  %v222 = vld [vmem:[%s215 + $0x30] sm:$0xff]
  %v230 = vunpack.c.l.b16 %v216
  %v231 = vunpack.c.h.b16 %v216
  %v232 = vunpack.c.l.b16 %v217
  %v233 = vunpack.c.h.b16 %v217
  %v234 = vunpack.c.l.b16 %v218
  %v235 = vunpack.c.h.b16 %v218
  %v236 = vunpack.c.l.b16 %v219
  %v237 = vunpack.c.h.b16 %v219
  %v238 = vunpack.c.l.b16 %v220
  %v239 = vunpack.c.h.b16 %v220
  %v240 = vunpack.c.l.b16 %v221
  %v241 = vunpack.c.h.b16 %v221
  %v242 = vunpack.c.l.b16 %v222
  %v243 = vunpack.c.h.b16 %v222
  %v244 = vpack.c.b16 %v232, %v230
  %v245 = vpack.c.b16 %v233, %v231
  %v246 = vpack.c.b16 %v236, %v234
  %v247 = vpack.c.b16 %v237, %v235
  %v248 = vpack.c.b16 %v240, %v238
  %v249 = vpack.c.b16 %v241, %v239
  %v250 = vpack.c.b16 %v242, %v242
  %v251 = vpack.c.b16 %v243, %v243
  %v257 = vsel %vm135, %v245, 0
  %v260 = vsel %vm135, %v247, 0
  %v263 = vsel %vm135, %v249, 0
  %v266 = vsel %vm135, %v251, 0
  %268 = vmatpush.bf16.msra.mxu0 %v123
  %269 = vmatpush.bf16.msra.mxu0 %v122
  %270 = vmatpush.bf16.msra.mxu0 %v121
  %271 = vmatpush.bf16.msra.mxu0 %v120
  %272 = vmatpush.bf16.msra.mxu0 %v119
  %273 = vmatpush.bf16.msra.mxu0 %v118
  %274 = vmatpush.bf16.msra.mxu0 %v117
  %275 = vmatpush.bf16.msra.mxu0 %v116
  %276 = vmatmul.bf16.gmra.mxu0 %v244
  %v277 = vpop.f32.mrf.mxu0
  %v278 = vadd.f32 %v43, %v277
  %v279 = vpop.f32.mrf.mxu0
  %v280 = vadd.f32 %v43, %v279
  %281 = vmatmul.bf16.gmra.mxu0 %v246
  %v282 = vpop.f32.mrf.mxu0
  %v283 = vadd.f32 %v43, %v282
  %v284 = vpop.f32.mrf.mxu0
  %v285 = vadd.f32 %v43, %v284
  %286 = vmatmul.bf16.gmra.mxu0 %v248
  %v287 = vpop.f32.mrf.mxu0
  %v288 = vadd.f32 %v43, %v287
  %v289 = vpop.f32.mrf.mxu0
  %v290 = vadd.f32 %v43, %v289
  %291 = vmatmul.bf16.gmra.mxu0 %v250
  %v292 = vpop.f32.mrf.mxu0
  %v293 = vadd.f32 %v43, %v292
  %v294 = vpop.f32.mrf.mxu0
  %295 = vdwg.mxu0
  %296 = vmatpush.bf16.msra.mxu0 0
  %297 = vmatpush.bf16.msra.mxu0 0
  %298 = vmatpush.bf16.msra.mxu0 0
  %299 = vmatpush.bf16.msra.mxu0 0
  %300 = vmatpush.bf16.msra.mxu0 0
  %301 = vmatpush.bf16.msra.mxu0 0
  %302 = vmatpush.bf16.msra.mxu0 %v150
  %303 = vmatpush.bf16.msra.mxu0 %v124
  %304 = vmatmul.bf16.gmra.mxu0 %v257
  %v305 = vpop.f32.mrf.mxu0
  %v306 = vadd.f32 %v278, %v305
  %v307 = vpop.f32.mrf.mxu0
  %v308 = vadd.f32 %v280, %v307
  %309 = vmatmul.bf16.gmra.mxu0 %v260
  %v310 = vpop.f32.mrf.mxu0
  %v311 = vadd.f32 %v283, %v310
  %v312 = vpop.f32.mrf.mxu0
  %v313 = vadd.f32 %v285, %v312
  %314 = vmatmul.bf16.gmra.mxu0 %v263
  %v315 = vpop.f32.mrf.mxu0
  %v316 = vadd.f32 %v288, %v315
  %v317 = vpop.f32.mrf.mxu0
  %v318 = vadd.f32 %v290, %v317
  %319 = vmatmul.bf16.gmra.mxu0 %v266
  %v320 = vpop.f32.mrf.mxu0
  %v321 = vadd.f32 %v293, %v320
  %v322 = vpop.f32.mrf.mxu0
  %323 = vdwg.mxu0
  %v324 = vmax.f32 %v306, 0.0
  %v325 = vmax.f32 %v308, 0.0
  %v326 = vmax.f32 %v311, 0.0
  %v327 = vmax.f32 %v313, 0.0
  %v328 = vmax.f32 %v316, 0.0
  %v329 = vmax.f32 %v318, 0.0
  %v330 = vmax.f32 %v321, 0.0
  %v331 = vmax.f32 %v208, %v324
  %v332 = vmax.f32 %v209, %v325
  %v333 = vmax.f32 %v210, %v326
  %v334 = vmax.f32 %v211, %v327
  %v335 = vmax.f32 %v212, %v328
  %v336 = vmax.f32 %v213, %v329
  %v337 = vmax.f32 %v214, %v330
  %s338 = scalar_lea.vmem %s0, 112
  %v339 = vld [vmem:[%s338] sm:$0xff]
  %v340 = vld [vmem:[%s338 + $0x8] sm:$0xff]
  %v341 = vld [vmem:[%s338 + $0x10] sm:$0xff]
  %v342 = vld [vmem:[%s338 + $0x18] sm:$0xff]
  %v343 = vld [vmem:[%s338 + $0x20] sm:$0xff]
  %v344 = vld [vmem:[%s338 + $0x28] sm:$0xff]
  %v345 = vld [vmem:[%s338 + $0x30] sm:$0xff]
  %v353 = vunpack.c.l.b16 %v339
  %v354 = vunpack.c.h.b16 %v339
  %v355 = vunpack.c.l.b16 %v340
  %v356 = vunpack.c.h.b16 %v340
  %v357 = vunpack.c.l.b16 %v341
  %v358 = vunpack.c.h.b16 %v341
  %v359 = vunpack.c.l.b16 %v342
  %v360 = vunpack.c.h.b16 %v342
  %v361 = vunpack.c.l.b16 %v343
  %v362 = vunpack.c.h.b16 %v343
  %v363 = vunpack.c.l.b16 %v344
  %v364 = vunpack.c.h.b16 %v344
  %v365 = vunpack.c.l.b16 %v345
  %v366 = vunpack.c.h.b16 %v345
  %v367 = vpack.c.b16 %v355, %v353
  %v368 = vpack.c.b16 %v356, %v354
  %v369 = vpack.c.b16 %v359, %v357
  %v370 = vpack.c.b16 %v360, %v358
  %v371 = vpack.c.b16 %v363, %v361
  %v372 = vpack.c.b16 %v364, %v362
  %v373 = vpack.c.b16 %v365, %v365
  %v374 = vpack.c.b16 %v366, %v366
  %v380 = vsel %vm135, %v368, 0
  %v383 = vsel %vm135, %v370, 0
  %v386 = vsel %vm135, %v372, 0
  %v389 = vsel %vm135, %v374, 0
  %391 = vmatpush.bf16.msra.mxu0 %v123
  %392 = vmatpush.bf16.msra.mxu0 %v122
  %393 = vmatpush.bf16.msra.mxu0 %v121
  %394 = vmatpush.bf16.msra.mxu0 %v120
  %395 = vmatpush.bf16.msra.mxu0 %v119
  %396 = vmatpush.bf16.msra.mxu0 %v118
  %397 = vmatpush.bf16.msra.mxu0 %v117
  %398 = vmatpush.bf16.msra.mxu0 %v116
  %399 = vmatmul.bf16.gmra.mxu0 %v367
  %v400 = vpop.f32.mrf.mxu0
  %v401 = vadd.f32 %v43, %v400
  %v402 = vpop.f32.mrf.mxu0
  %v403 = vadd.f32 %v43, %v402
  %404 = vmatmul.bf16.gmra.mxu0 %v369
  %v405 = vpop.f32.mrf.mxu0
  %v406 = vadd.f32 %v43, %v405
  %v407 = vpop.f32.mrf.mxu0
  %v408 = vadd.f32 %v43, %v407
  %409 = vmatmul.bf16.gmra.mxu0 %v371
  %v410 = vpop.f32.mrf.mxu0
  %v411 = vadd.f32 %v43, %v410
  %v412 = vpop.f32.mrf.mxu0
  %v413 = vadd.f32 %v43, %v412
  %414 = vmatmul.bf16.gmra.mxu0 %v373
  %v415 = vpop.f32.mrf.mxu0
  %v416 = vadd.f32 %v43, %v415
  %v417 = vpop.f32.mrf.mxu0
  %418 = vdwg.mxu0
  %419 = vmatpush.bf16.msra.mxu0 0
  %420 = vmatpush.bf16.msra.mxu0 0
  %421 = vmatpush.bf16.msra.mxu0 0
  %422 = vmatpush.bf16.msra.mxu0 0
  %423 = vmatpush.bf16.msra.mxu0 0
  %424 = vmatpush.bf16.msra.mxu0 0
  %425 = vmatpush.bf16.msra.mxu0 %v150
  %426 = vmatpush.bf16.msra.mxu0 %v124
  %427 = vmatmul.bf16.gmra.mxu0 %v380
  %v428 = vpop.f32.mrf.mxu0
  %v429 = vadd.f32 %v401, %v428
  %v430 = vpop.f32.mrf.mxu0
  %v431 = vadd.f32 %v403, %v430
  %432 = vmatmul.bf16.gmra.mxu0 %v383
  %v433 = vpop.f32.mrf.mxu0
  %v434 = vadd.f32 %v406, %v433
  %v435 = vpop.f32.mrf.mxu0
  %v436 = vadd.f32 %v408, %v435
  %437 = vmatmul.bf16.gmra.mxu0 %v386
  %v438 = vpop.f32.mrf.mxu0
  %v439 = vadd.f32 %v411, %v438
  %v440 = vpop.f32.mrf.mxu0
  %v441 = vadd.f32 %v413, %v440
  %442 = vmatmul.bf16.gmra.mxu0 %v389
  %v443 = vpop.f32.mrf.mxu0
  %v444 = vadd.f32 %v416, %v443
  %v445 = vpop.f32.mrf.mxu0
  %446 = vdwg.mxu0
  %v447 = vmax.f32 %v429, 0.0
  %v448 = vmax.f32 %v431, 0.0
  %v449 = vmax.f32 %v434, 0.0
  %v450 = vmax.f32 %v436, 0.0
  %v451 = vmax.f32 %v439, 0.0
  %v452 = vmax.f32 %v441, 0.0
  %v453 = vmax.f32 %v444, 0.0
  %v454 = vmax.f32 %v331, %v447
  %v455 = vmax.f32 %v332, %v448
  %v456 = vmax.f32 %v333, %v449
  %v457 = vmax.f32 %v334, %v450
  %v458 = vmax.f32 %v335, %v451
  %v459 = vmax.f32 %v336, %v452
  %v460 = vmax.f32 %v337, %v453
  %s461 = scalar_lea.vmem %s0, 168
  %v462 = vld [vmem:[%s461] sm:$0xff]
  %v463 = vld [vmem:[%s461 + $0x8] sm:$0xff]
  %v464 = vld [vmem:[%s461 + $0x10] sm:$0xff]
  %v465 = vld [vmem:[%s461 + $0x18] sm:$0xff]
  %v466 = vld [vmem:[%s461 + $0x20] sm:$0xff]
  %v467 = vld [vmem:[%s461 + $0x28] sm:$0xff]
  %v468 = vld [vmem:[%s461 + $0x30] sm:$0xff]
  %v476 = vunpack.c.l.b16 %v462
  %v477 = vunpack.c.h.b16 %v462
  %v478 = vunpack.c.l.b16 %v463
  %v479 = vunpack.c.h.b16 %v463
  %v480 = vunpack.c.l.b16 %v464
  %v481 = vunpack.c.h.b16 %v464
  %v482 = vunpack.c.l.b16 %v465
  %v483 = vunpack.c.h.b16 %v465
  %v484 = vunpack.c.l.b16 %v466
  %v485 = vunpack.c.h.b16 %v466
  %v486 = vunpack.c.l.b16 %v467
  %v487 = vunpack.c.h.b16 %v467
  %v488 = vunpack.c.l.b16 %v468
  %v489 = vunpack.c.h.b16 %v468
  %v490 = vpack.c.b16 %v478, %v476
  %v491 = vpack.c.b16 %v479, %v477
  %v492 = vpack.c.b16 %v482, %v480
  %v493 = vpack.c.b16 %v483, %v481
  %v494 = vpack.c.b16 %v486, %v484
  %v495 = vpack.c.b16 %v487, %v485
  %v496 = vpack.c.b16 %v488, %v488
  %v497 = vpack.c.b16 %v489, %v489
  %v503 = vsel %vm135, %v491, 0
  %v506 = vsel %vm135, %v493, 0
  %v509 = vsel %vm135, %v495, 0
  %v512 = vsel %vm135, %v497, 0
  %514 = vmatpush.bf16.msra.mxu0 %v123
  %515 = vmatpush.bf16.msra.mxu0 %v122
  %516 = vmatpush.bf16.msra.mxu0 %v121
  %517 = vmatpush.bf16.msra.mxu0 %v120
  %518 = vmatpush.bf16.msra.mxu0 %v119
  %519 = vmatpush.bf16.msra.mxu0 %v118
  %520 = vmatpush.bf16.msra.mxu0 %v117
  %521 = vmatpush.bf16.msra.mxu0 %v116
  %522 = vmatmul.bf16.gmra.mxu0 %v490
  %v523 = vpop.f32.mrf.mxu0
  %v524 = vadd.f32 %v43, %v523
  %v525 = vpop.f32.mrf.mxu0
  %v526 = vadd.f32 %v43, %v525
  %527 = vmatmul.bf16.gmra.mxu0 %v492
  %v528 = vpop.f32.mrf.mxu0
  %v529 = vadd.f32 %v43, %v528
  %v530 = vpop.f32.mrf.mxu0
  %v531 = vadd.f32 %v43, %v530
  %532 = vmatmul.bf16.gmra.mxu0 %v494
  %v533 = vpop.f32.mrf.mxu0
  %v534 = vadd.f32 %v43, %v533
  %v535 = vpop.f32.mrf.mxu0
  %v536 = vadd.f32 %v43, %v535
  %537 = vmatmul.bf16.gmra.mxu0 %v496
  %v538 = vpop.f32.mrf.mxu0
  %v539 = vadd.f32 %v43, %v538
  %v540 = vpop.f32.mrf.mxu0
  %541 = vdwg.mxu0
  %542 = vmatpush.bf16.msra.mxu0 0
  %543 = vmatpush.bf16.msra.mxu0 0
  %544 = vmatpush.bf16.msra.mxu0 0
  %545 = vmatpush.bf16.msra.mxu0 0
  %546 = vmatpush.bf16.msra.mxu0 0
  %547 = vmatpush.bf16.msra.mxu0 0
  %548 = vmatpush.bf16.msra.mxu0 %v150
  %549 = vmatpush.bf16.msra.mxu0 %v124
  %550 = vmatmul.bf16.gmra.mxu0 %v503
  %v551 = vpop.f32.mrf.mxu0
  %v552 = vadd.f32 %v524, %v551
  %v553 = vpop.f32.mrf.mxu0
  %v554 = vadd.f32 %v526, %v553
  %555 = vmatmul.bf16.gmra.mxu0 %v506
  %v556 = vpop.f32.mrf.mxu0
  %v557 = vadd.f32 %v529, %v556
  %v558 = vpop.f32.mrf.mxu0
  %v559 = vadd.f32 %v531, %v558
  %560 = vmatmul.bf16.gmra.mxu0 %v509
  %v561 = vpop.f32.mrf.mxu0
  %v562 = vadd.f32 %v534, %v561
  %v563 = vpop.f32.mrf.mxu0
  %v564 = vadd.f32 %v536, %v563
  %565 = vmatmul.bf16.gmra.mxu0 %v512
  %v566 = vpop.f32.mrf.mxu0
  %v567 = vadd.f32 %v539, %v566
  %v568 = vpop.f32.mrf.mxu0
  %569 = vdwg.mxu0
  %v570 = vmax.f32 %v552, 0.0
  %v571 = vmax.f32 %v554, 0.0
  %v572 = vmax.f32 %v557, 0.0
  %v573 = vmax.f32 %v559, 0.0
  %v574 = vmax.f32 %v562, 0.0
  %v575 = vmax.f32 %v564, 0.0
  %v576 = vmax.f32 %v567, 0.0
  %v577 = vmax.f32 %v454, %v570
  %v578 = vmax.f32 %v455, %v571
  %v579 = vmax.f32 %v456, %v572
  %v580 = vmax.f32 %v457, %v573
  %v581 = vmax.f32 %v458, %v574
  %v582 = vmax.f32 %v459, %v575
  %v583 = vmax.f32 %v460, %v576
  %v584 = vpack.c.bf16 %v577, %v577
  %v585 = vpack.c.bf16 %v578, %v578
  %v586 = vpack.c.bf16 %v579, %v579
  %v587 = vpack.c.bf16 %v580, %v580
  %v588 = vpack.c.bf16 %v581, %v581
  %v589 = vpack.c.bf16 %v582, %v582
  %v590 = vpack.c.bf16 %v583, %v583
  %vm591 = vcmask 125952
  %592 = vst.msk [vmem:[%s3] sm:$0xf] %vm591, %v584
  %593 = vst.msk [vmem:[%s3 + $0x4] sm:$0xf] %vm591, %v585
  %594 = vst.msk [vmem:[%s3 + $0x8] sm:$0xf] %vm591, %v586
  %595 = vst.msk [vmem:[%s3 + $0xc] sm:$0xf] %vm591, %v587
  %596 = vst.msk [vmem:[%s3 + $0x10] sm:$0xf] %vm591, %v588
  %597 = vst.msk [vmem:[%s3 + $0x14] sm:$0xf] %vm591, %v589
  %598 = vst.msk [vmem:[%s3 + $0x18] sm:$0xf] %vm591, %v590
  // Predicated region
  $region14: #{lenet5_forward.4} parent=0 // pred_check
    _
  $region15: #{lenet5_forward.4} parent=0 // pred_check_branch
    %600 = sbr.rel (0) target = $region17
  $region16: #{lenet5_forward.4} parent=0 // pred_region
    _
  $region17: #{lenet5_forward.4} parent=0 // pred_fallthru
    _
  // Predicated region
  $region18: #{lenet5_forward.4} parent=0 // pred_check
    _
  $region19: #{lenet5_forward.4} parent=0 // pred_check_branch
    %602 = sbr.rel (0) target = $region21
  $region20: #{lenet5_forward.4} parent=0 // pred_region
    _
  $region21: #{lenet5_forward.4} parent=0 // pred_fallthru
    _

// kernel: lenet5_forward.5
$region0: #{lenet5_forward.5}
  #allocation0 [shape = 'u32[]', space=smem, size = 0x4, offset = 0x4, fixed_abs, tag = 'smem constant byte address 0x4 - core index']
  #allocation1 [shape = 'u32[72,128]{1,0:T(1,128)}', space=vmem, size = 0x9000, scoped, tag = 'internal scratch']
  %s0 = inlined_call_operand.vmem [shape: bf16[8,400], index: 0, kind: input, shape index: {}]
  %s1 = inlined_call_operand.vmem [shape: bf16[400,120], index: 1, kind: input, shape index: {}]
  %s2 = inlined_call_operand.vmem [shape: f32[1,120], index: 2, kind: input, shape index: {}]
  %s3 = inlined_call_operand.vmem [shape: bf16[120,84], index: 3, kind: input, shape index: {}]
  %s4 = inlined_call_operand.vmem [shape: f32[1,84], index: 4, kind: input, shape index: {}]
  %s5 = inlined_call_operand.vmem [shape: bf16[84,128], index: 5, kind: input, shape index: {}]
  %s6 = inlined_call_operand.vmem [shape: f32[1,128], index: 6, kind: input, shape index: {}]
  %s7 = inlined_call_operand.vmem [shape: f32[8,128], index: 7, kind: output, shape index: {}]
  %s8 = sld [smem:[#allocation0]]
  $region38: #{lenet5_forward.5} parent=0
    _
  %s10 = ssub.s32 1, %s8
  %s11 = scalar_select 0, %s10, %s8
  // Predicated region
  $region2: #{lenet5_forward.5} parent=0 // pred_check
    _
  $region3: #{lenet5_forward.5} parent=0 // pred_check_branch
    %13 = sbr.rel (0) target = $region5
  $region4: #{lenet5_forward.5} parent=0 // pred_region
    _
  $region5: #{lenet5_forward.5} parent=0 // pred_fallthru
    _
  // Predicated region
  $region6: #{lenet5_forward.5} parent=0 // pred_check
    _
  $region7: #{lenet5_forward.5} parent=0 // pred_check_branch
    %15 = sbr.rel (0) target = $region9
  $region8: #{lenet5_forward.5} parent=0 // pred_region
    _
  $region9: #{lenet5_forward.5} parent=0 // pred_fallthru
    _
  // Predicated region
  $region10: #{lenet5_forward.5} parent=0 // pred_check
    _
  $region11: #{lenet5_forward.5} parent=0 // pred_check_branch
    %17 = sbr.rel (0) target = $region13
  $region12: #{lenet5_forward.5} parent=0 // pred_region
    _
  $region13: #{lenet5_forward.5} parent=0 // pred_fallthru
    _
  // Predicated region
  $region14: #{lenet5_forward.5} parent=0 // pred_check
    _
  $region15: #{lenet5_forward.5} parent=0 // pred_check_branch
    %19 = sbr.rel (0) target = $region17
  $region16: #{lenet5_forward.5} parent=0 // pred_region
    _
  $region17: #{lenet5_forward.5} parent=0 // pred_fallthru
    _
  // Predicated region
  $region18: #{lenet5_forward.5} parent=0 // pred_check
    _
  $region19: #{lenet5_forward.5} parent=0 // pred_check_branch
    %21 = sbr.rel (0) target = $region21
  $region20: #{lenet5_forward.5} parent=0 // pred_region
    _
  $region21: #{lenet5_forward.5} parent=0 // pred_fallthru
    _
  // Predicated region
  $region22: #{lenet5_forward.5} parent=0 // pred_check
    _
  $region23: #{lenet5_forward.5} parent=0 // pred_check_branch
    %23 = sbr.rel (0) target = $region25
  $region24: #{lenet5_forward.5} parent=0 // pred_region
    _
  $region25: #{lenet5_forward.5} parent=0 // pred_fallthru
    _
  // Predicated region
  $region26: #{lenet5_forward.5} parent=0 // pred_check
    _
  $region27: #{lenet5_forward.5} parent=0 // pred_check_branch
    %25 = sbr.rel (0) target = $region29
  $region28: #{lenet5_forward.5} parent=0 // pred_region
    _
  $region29: #{lenet5_forward.5} parent=0 // pred_fallthru
    _
  %v27 = vld [vmem:[%s0] sm:$0xff]
  %v28 = vld [vmem:[%s0 + $0x8] sm:$0xff]
  %v29 = vld [vmem:[%s1] sm:$0xf]
  %v30 = vld [vmem:[%s1 + $0x4] sm:$0xf]
  %v31 = vld [vmem:[%s1 + $0x8] sm:$0xf]
  %v32 = vld [vmem:[%s1 + $0xc] sm:$0xf]
  %v33 = vld [vmem:[%s1 + $0x10] sm:$0xf]
  %v34 = vld [vmem:[%s1 + $0x14] sm:$0xf]
  %v35 = vld [vmem:[%s1 + $0x18] sm:$0xf]
  %v36 = vld [vmem:[%s1 + $0x1c] sm:$0xf]
  %v37 = vld [vmem:[%s1 + $0x20] sm:$0xf]
  %v38 = vld [vmem:[%s1 + $0x24] sm:$0xf]
  %v39 = vld [vmem:[%s1 + $0x28] sm:$0xf]
  %v40 = vld [vmem:[%s1 + $0x2c] sm:$0xf]
  %v41 = vld [vmem:[%s1 + $0x30] sm:$0xf]
  %v42 = vld [vmem:[%s1 + $0x34] sm:$0xf]
  %v43 = vld [vmem:[%s1 + $0x38] sm:$0xf]
  %v44 = vld [vmem:[%s1 + $0x3c] sm:$0xf]
  %v45 = vld [vmem:[%s1 + $0x40] sm:$0xf]
  %v46 = vld [vmem:[%s1 + $0x44] sm:$0xf]
  %v47 = vld [vmem:[%s1 + $0x48] sm:$0xf]
  %v48 = vld [vmem:[%s1 + $0x4c] sm:$0xf]
  %v49 = vld [vmem:[%s1 + $0x50] sm:$0xf]
  %v50 = vld [vmem:[%s1 + $0x54] sm:$0xf]
  %v51 = vld [vmem:[%s1 + $0x58] sm:$0xf]
  %v52 = vld [vmem:[%s1 + $0x5c] sm:$0xf]
  %v53 = vld [vmem:[%s1 + $0x60] sm:$0xf]
  %v54 = vld [vmem:[%s1 + $0x64] sm:$0xf]
  %v55 = vld [vmem:[%s1 + $0x68] sm:$0xf]
  %v56 = vld [vmem:[%s1 + $0x6c] sm:$0xf]
  %v57 = vld [vmem:[%s1 + $0x70] sm:$0xf]
  %v58 = vld [vmem:[%s1 + $0x74] sm:$0xf]
  %v59 = vld [vmem:[%s1 + $0x78] sm:$0xf]
  %v60 = vld [vmem:[%s1 + $0x7c] sm:$0xf]
  %v61 = vld [vmem:[%s1 + $0x80] sm:$0xf]
  %v62 = vld [vmem:[%s1 + $0x84] sm:$0xf]
  %v63 = vld [vmem:[%s1 + $0x88] sm:$0xf]
  %v64 = vld [vmem:[%s1 + $0x8c] sm:$0xf]
  %v65 = vld [vmem:[%s1 + $0x90] sm:$0xf]
  %v66 = vld [vmem:[%s1 + $0x94] sm:$0xf]
  %v67 = vld [vmem:[%s1 + $0x98] sm:$0xf]
  %v68 = vld [vmem:[%s1 + $0x9c] sm:$0xf]
  %v69 = vld [vmem:[%s1 + $0xa0] sm:$0xf]
  %v70 = vld [vmem:[%s1 + $0xa4] sm:$0xf]
  %v71 = vld [vmem:[%s1 + $0xa8] sm:$0xf]
  %v72 = vld [vmem:[%s1 + $0xac] sm:$0xf]
  %v73 = vld [vmem:[%s1 + $0xb0] sm:$0xf]
  %v74 = vld [vmem:[%s1 + $0xb4] sm:$0xf]
  %v75 = vld [vmem:[%s1 + $0xb8] sm:$0xf]
  %v76 = vld [vmem:[%s1 + $0xbc] sm:$0xf]
  %v77 = vld [vmem:[%s1 + $0xc0] sm:$0xf]
  %v78 = vld [vmem:[%s1 + $0xc4] sm:$0xf]
  %v79 = vld [vmem:[%s2] sm:$0x1]
  %v81 = vperm.slane %v79, 0
  %v85 = vunpack.c.l.b16 %v27
  %v86 = vunpack.c.h.b16 %v27
  %v87 = vunpack.c.l.b16 %v28
  %v88 = vunpack.c.h.b16 %v28
  %v89 = vpack.c.b16 %v85, %v85
  %v90 = vpack.c.b16 %v86, %v86
  %v91 = vpack.c.b16 %v87, %v87
  %v92 = vpack.c.b16 %v88, %v88
  %v146 = vunpack.c.l.b16 %v29
  %v147 = vunpack.c.l.b16 %v30
  %v148 = vunpack.c.l.b16 %v31
  %v149 = vunpack.c.l.b16 %v32
  %v150 = vunpack.c.l.b16 %v33
  %v151 = vunpack.c.l.b16 %v34
  %v152 = vunpack.c.l.b16 %v35
  %v153 = vunpack.c.l.b16 %v36
  %v154 = vunpack.c.l.b16 %v37
  %v155 = vunpack.c.l.b16 %v38
  %v156 = vunpack.c.l.b16 %v39
  %v157 = vunpack.c.l.b16 %v40
  %v158 = vunpack.c.l.b16 %v41
  %v159 = vunpack.c.l.b16 %v42
  %v160 = vunpack.c.l.b16 %v43
  %v161 = vunpack.c.l.b16 %v44
  %v162 = vunpack.c.l.b16 %v45
  %v163 = vunpack.c.l.b16 %v46
  %v164 = vunpack.c.l.b16 %v47
  %v165 = vunpack.c.l.b16 %v48
  %v166 = vunpack.c.l.b16 %v49
  %v167 = vunpack.c.l.b16 %v50
  %v168 = vunpack.c.l.b16 %v51
  %v169 = vunpack.c.l.b16 %v52
  %v170 = vunpack.c.l.b16 %v53
  %v171 = vunpack.c.l.b16 %v54
  %v172 = vunpack.c.l.b16 %v55
  %v173 = vunpack.c.l.b16 %v56
  %v174 = vunpack.c.l.b16 %v57
  %v175 = vunpack.c.l.b16 %v58
  %v176 = vunpack.c.l.b16 %v59
  %v177 = vunpack.c.l.b16 %v60
  %v178 = vunpack.c.l.b16 %v61
  %v179 = vunpack.c.l.b16 %v62
  %v180 = vunpack.c.l.b16 %v63
  %v181 = vunpack.c.l.b16 %v64
  %v182 = vunpack.c.l.b16 %v65
  %v183 = vunpack.c.l.b16 %v66
  %v184 = vunpack.c.l.b16 %v67
  %v185 = vunpack.c.l.b16 %v68
  %v186 = vunpack.c.l.b16 %v69
  %v187 = vunpack.c.l.b16 %v70
  %v188 = vunpack.c.l.b16 %v71
  %v189 = vunpack.c.l.b16 %v72
  %v190 = vunpack.c.l.b16 %v73
  %v191 = vunpack.c.l.b16 %v74
  %v192 = vunpack.c.l.b16 %v75
  %v193 = vunpack.c.l.b16 %v76
  %v194 = vunpack.c.l.b16 %v77
  %v195 = vunpack.c.l.b16 %v78
  %v196 = vpack.c.b16 %v147, %v146
  %v197 = vpack.c.b16 %v149, %v148
  %v198 = vpack.c.b16 %v151, %v150
  %v199 = vpack.c.b16 %v153, %v152
  %v200 = vpack.c.b16 %v155, %v154
  %v201 = vpack.c.b16 %v157, %v156
  %v202 = vpack.c.b16 %v159, %v158
  %v203 = vpack.c.b16 %v161, %v160
  %v204 = vpack.c.b16 %v163, %v162
  %v205 = vpack.c.b16 %v165, %v164
  %v206 = vpack.c.b16 %v167, %v166
  %v207 = vpack.c.b16 %v169, %v168
  %v208 = vpack.c.b16 %v171, %v170
  %v209 = vpack.c.b16 %v173, %v172
  %v210 = vpack.c.b16 %v175, %v174
  %v211 = vpack.c.b16 %v177, %v176
  %v212 = vpack.c.b16 %v179, %v178
  %v213 = vpack.c.b16 %v181, %v180
  %v214 = vpack.c.b16 %v183, %v182
  %v215 = vpack.c.b16 %v185, %v184
  %v216 = vpack.c.b16 %v187, %v186
  %v217 = vpack.c.b16 %v189, %v188
  %v218 = vpack.c.b16 %v191, %v190
  %v219 = vpack.c.b16 %v193, %v192
  %v220 = vpack.c.b16 %v195, %v194
  %vm246 = vcmask 130048
  %v248 = vsel %vm246, %v92, 0
  %250 = vmatpush.bf16.msra.mxu0 %v203
  %251 = vmatpush.bf16.msra.mxu0 %v202
  %252 = vmatpush.bf16.msra.mxu0 %v201
  %253 = vmatpush.bf16.msra.mxu0 %v200
  %254 = vmatpush.bf16.msra.mxu0 %v199
  %255 = vmatpush.bf16.msra.mxu0 %v198
  %256 = vmatpush.bf16.msra.mxu0 %v197
  %257 = vmatpush.bf16.msra.mxu0 %v196
  %258 = vmatmul.bf16.gmra.mxu0 %v89
  %v259 = vpop.f32.mrf.mxu0
  %v260 = vadd.f32 %v81, %v259
  %v261 = vpop.f32.mrf.mxu0
  %262 = vdwg.mxu0
  %263 = vmatpush.bf16.msra.mxu0 %v211
  %264 = vmatpush.bf16.msra.mxu0 %v210
  %265 = vmatpush.bf16.msra.mxu0 %v209
  %266 = vmatpush.bf16.msra.mxu0 %v208
  %267 = vmatpush.bf16.msra.mxu0 %v207
  %268 = vmatpush.bf16.msra.mxu0 %v206
  %269 = vmatpush.bf16.msra.mxu0 %v205
  %270 = vmatpush.bf16.msra.mxu0 %v204
  %271 = vmatmul.bf16.gmra.mxu0 %v90
  %v272 = vpop.f32.mrf.mxu0
  %v273 = vadd.f32 %v260, %v272
  %v274 = vpop.f32.mrf.mxu0
  %275 = vdwg.mxu0
  %276 = vmatpush.bf16.msra.mxu0 %v219
  %277 = vmatpush.bf16.msra.mxu0 %v218
  %278 = vmatpush.bf16.msra.mxu0 %v217
  %279 = vmatpush.bf16.msra.mxu0 %v216
  %280 = vmatpush.bf16.msra.mxu0 %v215
  %281 = vmatpush.bf16.msra.mxu0 %v214
  %282 = vmatpush.bf16.msra.mxu0 %v213
  %283 = vmatpush.bf16.msra.mxu0 %v212
  %284 = vmatmul.bf16.gmra.mxu0 %v91
  %v285 = vpop.f32.mrf.mxu0
  %v286 = vadd.f32 %v273, %v285
  %v287 = vpop.f32.mrf.mxu0
  %288 = vdwg.mxu0
  %289 = vmatpush.bf16.msra.mxu0 0
  %290 = vmatpush.bf16.msra.mxu0 0
  %291 = vmatpush.bf16.msra.mxu0 0
  %292 = vmatpush.bf16.msra.mxu0 0
  %293 = vmatpush.bf16.msra.mxu0 0
  %294 = vmatpush.bf16.msra.mxu0 0
  %295 = vmatpush.bf16.msra.mxu0 0
  %296 = vmatpush.bf16.msra.mxu0 %v220
  %297 = vmatmul.bf16.gmra.mxu0 %v248
  %v298 = vpop.f32.mrf.mxu0
  %v299 = vadd.f32 %v286, %v298
  %v300 = vpop.f32.mrf.mxu0
  %301 = vdwg.mxu0
  %v302 = vmax.f32 %v299, 0.0
  %v303 = vpack.c.bf16 %v302, %v302
  %v304 = vld [vmem:[%s3] sm:$0xf]
  %v305 = vld [vmem:[%s3 + $0x4] sm:$0xf]
  %v306 = vld [vmem:[%s3 + $0x8] sm:$0xf]
  %v307 = vld [vmem:[%s3 + $0xc] sm:$0xf]
  %v308 = vld [vmem:[%s3 + $0x10] sm:$0xf]
  %v309 = vld [vmem:[%s3 + $0x14] sm:$0xf]
  %v310 = vld [vmem:[%s3 + $0x18] sm:$0xf]
  %v311 = vld [vmem:[%s3 + $0x1c] sm:$0xf]
  %v312 = vld [vmem:[%s3 + $0x20] sm:$0xf]
  %v313 = vld [vmem:[%s3 + $0x24] sm:$0xf]
  %v314 = vld [vmem:[%s3 + $0x28] sm:$0xf]
  %v315 = vld [vmem:[%s3 + $0x2c] sm:$0xf]
  %v316 = vld [vmem:[%s3 + $0x30] sm:$0xf]
  %v317 = vld [vmem:[%s3 + $0x34] sm:$0xf]
  %v318 = vld [vmem:[%s3 + $0x38] sm:$0xf]
  %v319 = vld [vmem:[%s4] sm:$0x1]
  %v321 = vperm.slane %v319, 0
  %v338 = vunpack.c.l.b16 %v304
  %v339 = vunpack.c.l.b16 %v305
  %v340 = vunpack.c.l.b16 %v306
  %v341 = vunpack.c.l.b16 %v307
  %v342 = vunpack.c.l.b16 %v308
  %v343 = vunpack.c.l.b16 %v309
  %v344 = vunpack.c.l.b16 %v310
  %v345 = vunpack.c.l.b16 %v311
  %v346 = vunpack.c.l.b16 %v312
  %v347 = vunpack.c.l.b16 %v313
  %v348 = vunpack.c.l.b16 %v314
  %v349 = vunpack.c.l.b16 %v315
  %v350 = vunpack.c.l.b16 %v316
  %v351 = vunpack.c.l.b16 %v317
  %v352 = vunpack.c.l.b16 %v318
  %v353 = vpack.c.b16 %v339, %v338
  %v354 = vpack.c.b16 %v341, %v340
  %v355 = vpack.c.b16 %v343, %v342
  %v356 = vpack.c.b16 %v345, %v344
  %v357 = vpack.c.b16 %v347, %v346
  %v358 = vpack.c.b16 %v349, %v348
  %v359 = vpack.c.b16 %v351, %v350
  %v360 = vpack.c.b16 %v352, %v352
  %vm368 = vcmask 982016
  %v370 = vsel %vm368, %v303, 0
  %vm372 = vcmask 1043456
  %v374 = vsel %vm372, %v360, 0
  %376 = vmatpush.bf16.msra.mxu0 %v374
  %377 = vmatpush.bf16.msra.mxu0 %v359
  %378 = vmatpush.bf16.msra.mxu0 %v358
  %379 = vmatpush.bf16.msra.mxu0 %v357
  %380 = vmatpush.bf16.msra.mxu0 %v356
  %381 = vmatpush.bf16.msra.mxu0 %v355
  %382 = vmatpush.bf16.msra.mxu0 %v354
  %383 = vmatpush.bf16.msra.mxu0 %v353
  %384 = vmatmul.bf16.gmra.mxu0 %v370
  %v385 = vpop.f32.mrf.mxu0
  %v386 = vadd.f32 %v321, %v385
  %v387 = vpop.f32.mrf.mxu0
  %388 = vdwg.mxu0
  %v389 = vmax.f32 %v386, 0.0
  %v390 = vpack.c.bf16 %v389, %v389
  %v391 = vld [vmem:[%s5] sm:$0xf]
  %v392 = vld [vmem:[%s5 + $0x4] sm:$0xf]
  %v393 = vld [vmem:[%s5 + $0x8] sm:$0xf]
  %v394 = vld [vmem:[%s5 + $0xc] sm:$0xf]
  %v395 = vld [vmem:[%s5 + $0x10] sm:$0xf]
  %v396 = vld [vmem:[%s5 + $0x14] sm:$0xf]
  %v397 = vld [vmem:[%s5 + $0x18] sm:$0xf]
  %v398 = vld [vmem:[%s5 + $0x1c] sm:$0xf]
  %v399 = vld [vmem:[%s5 + $0x20] sm:$0xf]
  %v400 = vld [vmem:[%s5 + $0x24] sm:$0xf]
  %v401 = vld [vmem:[%s5 + $0x28] sm:$0x3]
  %v402 = vld [vmem:[%s6] sm:$0x1]
  %v404 = vperm.slane %v402, 0
  %v417 = vunpack.c.l.b16 %v391
  %v418 = vunpack.c.l.b16 %v392
  %v419 = vunpack.c.l.b16 %v393
  %v420 = vunpack.c.l.b16 %v394
  %v421 = vunpack.c.l.b16 %v395
  %v422 = vunpack.c.l.b16 %v396
  %v423 = vunpack.c.l.b16 %v397
  %v424 = vunpack.c.l.b16 %v398
  %v425 = vunpack.c.l.b16 %v399
  %v426 = vunpack.c.l.b16 %v400
  %v427 = vunpack.c.l.b16 %v401
  %v428 = vpack.c.b16 %v418, %v417
  %v429 = vpack.c.b16 %v420, %v419
  %v430 = vpack.c.b16 %v422, %v421
  %v431 = vpack.c.b16 %v424, %v423
  %v432 = vpack.c.b16 %v426, %v425
  %v433 = vpack.c.b16 %v427, %v427
  %vm439 = vcmask 687104
  %v441 = vsel %vm439, %v390, 0
  %vm443 = vcmask 1041408
  %v445 = vsel %vm443, %v433, 0
  %447 = vmatpush.bf16.msra.mxu0 0
  %448 = vmatpush.bf16.msra.mxu0 0
  %449 = vmatpush.bf16.msra.mxu0 %v445
  %450 = vmatpush.bf16.msra.mxu0 %v432
  %451 = vmatpush.bf16.msra.mxu0 %v431
  %452 = vmatpush.bf16.msra.mxu0 %v430
  %453 = vmatpush.bf16.msra.mxu0 %v429
  %454 = vmatpush.bf16.msra.mxu0 %v428
  %455 = vmatmul.bf16.gmra.mxu0 %v441
  %v456 = vpop.f32.mrf.mxu0
  %v457 = vadd.f32 %v404, %v456
  %v458 = vpop.f32.mrf.mxu0
  %459 = vdwg.mxu0
  %460 = vst [vmem:[%s7] sm:$0xff] %v457
  // Predicated region
  $region30: #{lenet5_forward.5} parent=0 // pred_check
    _
  $region31: #{lenet5_forward.5} parent=0 // pred_check_branch
    %462 = sbr.rel (0) target = $region33
  $region32: #{lenet5_forward.5} parent=0 // pred_region
    _
  $region33: #{lenet5_forward.5} parent=0 // pred_fallthru
    _
  // Predicated region
  $region34: #{lenet5_forward.5} parent=0 // pred_check
    _
  $region35: #{lenet5_forward.5} parent=0 // pred_check_branch
    %464 = sbr.rel (0) target = $region37
  $region36: #{lenet5_forward.5} parent=0 // pred_region
    _
  $region37: #{lenet5_forward.5} parent=0 // pred_fallthru
    _

</llo_original>
